<compile_context>
chip_gen: v7x
topology: tpu7x:2x2x1
jax: 0.10.0
libtpu: 0.0.40
codegen_flags: <defaults>
</compile_context>

<pallas_src>
from functools import partial

import jax
import jax.numpy as jnp
from jax.experimental import pallas as pl
from jax.experimental.pallas import tpu as pltpu


def _round_up(x, m):
    return ((x + m - 1) // m) * m


def _cdiv(a, b):
    return -(-a // b)


# ----------------------------------------------------------------------------
# Pallas kernel: fused direct conv (k matmuls, K = k*Cip) + folded BN + SiLU
# ----------------------------------------------------------------------------
def _conv_bn_silu_kernel(x_ref, w_ref, s_ref, b_ref, o_ref, *, k, stride, th, wout):
    """One (batch, row-tile, cout-tile) grid step.

    x_ref: (1, Hp_x, Wout, k*Cip)  bf16 W-im2col'd padded input (full image)
    w_ref: (k, k*Cip, TCO)         bf16 per-kh weight matrices (kw/Cin folded into rows)
    s_ref: (1, TCO)                f32 folded BN scale  (gamma / sqrt(var+eps))
    b_ref: (1, TCO)                f32 folded BN bias   (beta - mean*scale)
    o_ref: (1, th, Wout, TCO)      f32 lane-dense output tile
    """
    kc = w_ref.shape[1]            # k * Cip (contraction width per matmul)
    tco = o_ref.shape[-1]

    r0 = pl.program_id(1) * (th * stride)
    if (th * stride) % 8 == 0:
        r0 = pl.multiple_of(r0, 8)

    acc = jnp.zeros((th * wout, tco), jnp.float32)
    for kh in range(k):
        if stride == 1:
            lhs = x_ref[0, pl.ds(r0 + kh, th), :, :]
        else:
            # Only the H stride remains strided (a major, non-sublane dim);
            # the W stride was folded into the wrapper-side repack.
            lhs = x_ref[0, pl.ds(r0 + kh, th, stride), :, :]
        lhs = lhs.reshape(th * wout, kc)
        acc = acc + jnp.dot(lhs, w_ref[kh], preferred_element_type=jnp.float32)

    y = acc * s_ref[...] + b_ref[...]          # folded BN (f32 epilogue)
    y = y * jax.nn.sigmoid(y)                  # SiLU
    o_ref[...] = y.reshape(1, th, wout, tco).astype(o_ref.dtype)


# ----------------------------------------------------------------------------
# Wrapper
# ----------------------------------------------------------------------------
def base_conv_forward(x_nchw, w_oihw, gamma, beta, mean, var, *, ksize, stride,
                      eps=1e-5):
    """BaseConv forward: Conv2d(pad=(k-1)//2, groups=1, bias=False) -> BN -> SiLU."""
    N, Cin, H, W = x_nchw.shape
    Cout = w_oihw.shape[0]
    k = ksize
    pad = (k - 1) // 2
    Hout = (H + 2 * pad - k) // stride + 1
    Wout = (W + 2 * pad - k) // stride + 1
    Hp, Wp = H + 2 * pad, W + 2 * pad

    Cip = _round_up(Cin, 8)        # per-tap channel count (sublane friendly)
    Kc = k * Cip                   # folded kw/Cin contraction width
    TCO = 128                      # lane-dense Cout tile
    Cop = _round_up(Cout, TCO)
    n_co = Cop // TCO

    # Row tile: keep the f32 accumulator <= (256, 128) (= 32 vregs).
    # (For extremely wide images W-tiling would also be needed; not required here.)
    th = max(1, min(Hout, 256 // max(Wout, 1)))
    n_rt = _cdiv(Hout, th)
    # Best-effort megacore balance on v7x when the batch axis is odd.
    if N % 2 == 1 and n_rt % 2 == 1 and Hout > 1 and th > 1:
        th = max(1, _cdiv(th, 2))
        n_rt = _cdiv(Hout, th)
    Hout_pad = n_rt * th

    # Extra bottom rows so the (padded) last row tile reads stay in bounds.
    Hp_need = (Hout_pad - 1) * stride + k
    extra_h = max(0, Hp_need - Hp)
    Hp_x = Hp + extra_h

    # NCHW -> NHWC, spatial + channel zero-pad, bf16 cast (one fused XLA copy).
    x_nhwc = jnp.transpose(x_nchw, (0, 2, 3, 1))
    xpad = jnp.pad(x_nhwc, ((0, 0), (pad, pad + extra_h), (pad, pad),
                            (0, Cip - Cin))).astype(jnp.bfloat16)

    # Fold the kw taps (and the W stride) into the channel axis:
    #   x_cat[n, h, wo, kw*Cip + c] = xpad[n, h, wo*stride + kw, c]
    cols = [xpad[:, :, kw: kw + (Wout - 1) * stride + 1: stride, :]
            for kw in range(k)]
    x_cat = jnp.concatenate(cols, axis=-1)                 # (N, Hp_x, Wout, Kc)

    # Weights: (Cout, Cin, kh, kw) -> (kh, kw*Cip + cin, Cop), bf16, zero padded.
    wt = jnp.transpose(w_oihw, (2, 3, 1, 0))               # (kh, kw, Cin, Cout)
    wt = jnp.pad(wt, ((0, 0), (0, 0), (0, Cip - Cin), (0, Cop - Cout)))
    wt = wt.reshape(k, Kc, Cop).astype(jnp.bfloat16)

    # Fold BN (inference mode) into a per-channel affine.
    scale = gamma / jnp.sqrt(var + eps)
    bias = beta - mean * scale
    s = jnp.pad(scale, (0, Cop - Cout)).reshape(1, Cop).astype(jnp.float32)
    b = jnp.pad(bias, (0, Cop - Cout)).reshape(1, Cop).astype(jnp.float32)

    # Scoped-VMEM limit from the actual block footprints (+ headroom).
    x_blk = Hp_x * Wout * Kc * 2
    w_blk = k * Kc * TCO * 2
    sb_blk = 2 * TCO * 4
    o_blk = th * Wout * TCO * 4
    acc_b = th * Wout * TCO * 4
    est = 2 * (x_blk + w_blk + sb_blk + o_blk) + acc_b
    vmem_bytes = int(min(100 * (1 << 20),
                         max(32 * (1 << 20), int(est * 1.3) + (2 << 20))))

    kernel = partial(_conv_bn_silu_kernel, k=k, stride=stride, th=th, wout=Wout)
    out = pl.pallas_call(
        kernel,
        out_shape=jax.ShapeDtypeStruct((N, Hout_pad, Wout, Cop), jnp.float32),
        grid=(N, n_rt, n_co),
        in_specs=[
            # Full W-im2col'd image of one batch element; block index constant in
            # the row-tile / cout-tile axes so it is DMA'd once per image.
            pl.BlockSpec((1, Hp_x, Wout, Kc), lambda n, i, j: (n, 0, 0, 0)),
            pl.BlockSpec((k, Kc, TCO), lambda n, i, j: (0, 0, j)),
            pl.BlockSpec((1, TCO), lambda n, i, j: (0, j)),
            pl.BlockSpec((1, TCO), lambda n, i, j: (0, j)),
        ],
        out_specs=pl.BlockSpec((1, th, Wout, TCO), lambda n, i, j: (n, i, 0, j)),
        compiler_params=pltpu.CompilerParams(
            dimension_semantics=("parallel", "parallel", "parallel"),
            vmem_limit_bytes=vmem_bytes),
    )(x_cat, wt, s, b)

    out = out[:, :Hout, :, :Cout]               # drop row / lane padding
    return jnp.transpose(out, (0, 3, 1, 2))     # back to NCHW (module contract)


# ----------------------------------------------------------------------------
# Pure-JAX reference (lax.conv) for checking
# ----------------------------------------------------------------------------
def base_conv_reference(x_nchw, w_oihw, gamma, beta, mean, var, *, ksize, stride,
                        eps=1e-5, quantize_like_kernel=False):
    if quantize_like_kernel:
        # Match the kernel's bf16 operand quantization (f32 accumulation).
        x_nchw = x_nchw.astype(jnp.bfloat16).astype(jnp.float32)
        w_oihw = w_oihw.astype(jnp.bfloat16).astype(jnp.float32)
    pad = (ksize - 1) // 2
    y = jax.lax.conv_general_dilated(
        x_nchw, w_oihw, (stride, stride), [(pad, pad), (pad, pad)],
        dimension_numbers=("NCHW", "OIHW", "NCHW"),
        precision=jax.lax.Precision.HIGHEST)
    y = (y - mean[None, :, None, None]) / jnp.sqrt(var + eps)[None, :, None, None]
    y = y * gamma[None, :, None, None] + beta[None, :, None, None]
    return y * jax.nn.sigmoid(y)


if __name__ == "__main__":
    # BaseConv(in_channels=4, out_channels=8, ksize=3, stride=1, groups=1,
    #          bias=False, act='silu')
    in_channels, out_channels, ksize, stride = 4, 8, 3, 1
    N, H, W = 2, 16, 16

    key = jax.random.PRNGKey(0)
    kx, kw, kg, kb, km, kv = jax.random.split(key, 6)
    x = jax.random.normal(kx, (N, in_channels, H, W), jnp.float32)
    w = 0.2 * jax.random.normal(kw, (out_channels, in_channels, ksize, ksize),
                                jnp.float32)
    gamma = 1.0 + 0.1 * jax.random.normal(kg, (out_channels,), jnp.float32)
    beta = 0.1 * jax.random.normal(kb, (out_channels,), jnp.float32)
    mean = 0.05 * jax.random.normal(km, (out_channels,), jnp.float32)
    var = 1.0 + 0.1 * jax.random.uniform(kv, (out_channels,), jnp.float32)

    fwd = jax.jit(partial(base_conv_forward, ksize=ksize, stride=stride))
    out = jax.block_until_ready(fwd(x, w, gamma, beta, mean, var))
    assert out.shape == (N, out_channels, H, W), out.shape

    # Tight check against a reference with matching bf16 operand quantization
    # (only accumulation-order / transcendental differences remain).
    ref_q = base_conv_reference(x, w, gamma, beta, mean, var, ksize=ksize,
                                stride=stride, quantize_like_kernel=True)
    err_q = float(jnp.max(jnp.abs(out - ref_q)))
    assert err_q < 5e-3, f"mismatch vs quantization-matched reference: {err_q}"

    # Loose semantic check against the full-f32 reference (bf16 MXU operands).
    ref_f = base_conv_reference(x, w, gamma, beta, mean, var, ksize=ksize,
                                stride=stride, quantize_like_kernel=False)
    err_f = float(jnp.max(jnp.abs(out - ref_f)))
    assert err_f < 4e-2, f"mismatch vs f32 reference: {err_f}"

    print("KERNEL_OK")
</pallas_src>

<mosaic_0001>
module attributes {stable_mosaic.version = 11 : i64} {
  func.func @_conv_bn_silu_kernel(%arg0: i32, %arg1: i32, %arg2: i32, %arg3: memref<1x18x16x24xbf16, #tpu.memory_space<vmem>>, %arg4: memref<3x24x128xbf16, #tpu.memory_space<vmem>>, %arg5: memref<1x128xf32, #tpu.memory_space<vmem>>, %arg6: memref<1x128xf32, #tpu.memory_space<vmem>>, %arg7: memref<1x16x16x128xf32, #tpu.memory_space<vmem>>) attributes {dimension_semantics = [#tpu.dimension_semantics<parallel>, #tpu.dimension_semantics<parallel>, #tpu.dimension_semantics<parallel>], iteration_bounds = array<i64: 2, 1, 1>, scalar_prefetch = 0 : i64, scratch_operands = 0 : i64, tpu.core_type = #tpu.core_type<tc>, window_params = [{transform_indices = @transform_0, window_bounds = array<i64: 1, 18, 16, 24>}, {transform_indices = @transform_1, window_bounds = array<i64: 3, 24, 128>}, {transform_indices = @transform_2, window_bounds = array<i64: 1, 128>}, {transform_indices = @transform_3, window_bounds = array<i64: 1, 128>}, {transform_indices = @transform_4, window_bounds = array<i64: 1, 16, 16, 128>}]} {
    %c16_i32 = arith.constant 16 : i32
    %0 = arith.muli %arg1, %c16_i32 : i32
    %1 = tpu.assume_multiple %0, 8 : i32
    %cst = arith.constant 0.000000e+00 : f32
    %2 = vector.broadcast %cst : f32 to vector<256x128xf32>
    %c0_i32 = arith.constant 0 : i32
    %3 = arith.addi %1, %c0_i32 : i32
    %c0 = arith.constant 0 : index
    %4 = arith.index_cast %3 : i32 to index
    %c0_0 = arith.constant 0 : index
    %c0_1 = arith.constant 0 : index
    %5 = vector.load %arg3[%c0, %4, %c0_0, %c0_1] : memref<1x18x16x24xbf16, #tpu.memory_space<vmem>>, vector<1x16x16x24xbf16>
    %6 = vector.shape_cast %5 : vector<1x16x16x24xbf16> to vector<16x16x24xbf16>
    %7 = vector.shape_cast %6 : vector<16x16x24xbf16> to vector<256x24xbf16>
    %c0_2 = arith.constant 0 : index
    %c0_3 = arith.constant 0 : index
    %c0_4 = arith.constant 0 : index
    %8 = vector.load %arg4[%c0_2, %c0_3, %c0_4] : memref<3x24x128xbf16, #tpu.memory_space<vmem>>, vector<1x24x128xbf16>
    %9 = vector.shape_cast %8 : vector<1x24x128xbf16> to vector<24x128xbf16>
    %cst_5 = arith.constant dense<0.000000e+00> : vector<256x128xf32>
    %10 = tpu.matmul %7, %9, %cst_5 {dimension_numbers = #tpu.dot_dimension_numbers<[1], [0], [0], [1], [0, 0, 1, 1], [], []>} : vector<256x24xbf16>, vector<24x128xbf16>, vector<256x128xf32> -> vector<256x128xf32>
    %11 = arith.addf %2, %10 : vector<256x128xf32>
    %c1_i32 = arith.constant 1 : i32
    %12 = arith.addi %1, %c1_i32 : i32
    %c0_6 = arith.constant 0 : index
    %13 = arith.index_cast %12 : i32 to index
    %c0_7 = arith.constant 0 : index
    %c0_8 = arith.constant 0 : index
    %14 = vector.load %arg3[%c0_6, %13, %c0_7, %c0_8] : memref<1x18x16x24xbf16, #tpu.memory_space<vmem>>, vector<1x16x16x24xbf16>
    %15 = vector.shape_cast %14 : vector<1x16x16x24xbf16> to vector<16x16x24xbf16>
    %16 = vector.shape_cast %15 : vector<16x16x24xbf16> to vector<256x24xbf16>
    %c1 = arith.constant 1 : index
    %c0_9 = arith.constant 0 : index
    %c0_10 = arith.constant 0 : index
    %17 = vector.load %arg4[%c1, %c0_9, %c0_10] : memref<3x24x128xbf16, #tpu.memory_space<vmem>>, vector<1x24x128xbf16>
    %18 = vector.shape_cast %17 : vector<1x24x128xbf16> to vector<24x128xbf16>
    %cst_11 = arith.constant dense<0.000000e+00> : vector<256x128xf32>
    %19 = tpu.matmul %16, %18, %cst_11 {dimension_numbers = #tpu.dot_dimension_numbers<[1], [0], [0], [1], [0, 0, 1, 1], [], []>} : vector<256x24xbf16>, vector<24x128xbf16>, vector<256x128xf32> -> vector<256x128xf32>
    %20 = arith.addf %11, %19 : vector<256x128xf32>
    %c2_i32 = arith.constant 2 : i32
    %21 = arith.addi %1, %c2_i32 : i32
    %c0_12 = arith.constant 0 : index
    %22 = arith.index_cast %21 : i32 to index
    %c0_13 = arith.constant 0 : index
    %c0_14 = arith.constant 0 : index
    %23 = vector.load %arg3[%c0_12, %22, %c0_13, %c0_14] : memref<1x18x16x24xbf16, #tpu.memory_space<vmem>>, vector<1x16x16x24xbf16>
    %24 = vector.shape_cast %23 : vector<1x16x16x24xbf16> to vector<16x16x24xbf16>
    %25 = vector.shape_cast %24 : vector<16x16x24xbf16> to vector<256x24xbf16>
    %c2 = arith.constant 2 : index
    %c0_15 = arith.constant 0 : index
    %c0_16 = arith.constant 0 : index
    %26 = vector.load %arg4[%c2, %c0_15, %c0_16] : memref<3x24x128xbf16, #tpu.memory_space<vmem>>, vector<1x24x128xbf16>
    %27 = vector.shape_cast %26 : vector<1x24x128xbf16> to vector<24x128xbf16>
    %cst_17 = arith.constant dense<0.000000e+00> : vector<256x128xf32>
    %28 = tpu.matmul %25, %27, %cst_17 {dimension_numbers = #tpu.dot_dimension_numbers<[1], [0], [0], [1], [0, 0, 1, 1], [], []>} : vector<256x24xbf16>, vector<24x128xbf16>, vector<256x128xf32> -> vector<256x128xf32>
    %29 = arith.addf %20, %28 : vector<256x128xf32>
    %c0_18 = arith.constant 0 : index
    %c0_19 = arith.constant 0 : index
    %30 = vector.load %arg5[%c0_18, %c0_19] : memref<1x128xf32, #tpu.memory_space<vmem>>, vector<1x128xf32>
    %31 = vector.broadcast %30 : vector<1x128xf32> to vector<256x128xf32>
    %32 = arith.mulf %29, %31 : vector<256x128xf32>
    %c0_20 = arith.constant 0 : index
    %c0_21 = arith.constant 0 : index
    %33 = vector.load %arg6[%c0_20, %c0_21] : memref<1x128xf32, #tpu.memory_space<vmem>>, vector<1x128xf32>
    %34 = vector.broadcast %33 : vector<1x128xf32> to vector<256x128xf32>
    %35 = arith.addf %32, %34 : vector<256x128xf32>
    %36 = arith.negf %35 : vector<256x128xf32>
    %37 = math.exp %36 : vector<256x128xf32>
    %cst_22 = arith.constant 1.000000e+00 : f32
    %38 = vector.broadcast %cst_22 : f32 to vector<256x128xf32>
    %39 = arith.addf %38, %37 : vector<256x128xf32>
    %40 = arith.divf %38, %39 : vector<256x128xf32>
    %41 = arith.mulf %35, %40 : vector<256x128xf32>
    %42 = vector.shape_cast %41 : vector<256x128xf32> to vector<1x16x16x128xf32>
    %c0_23 = arith.constant 0 : index
    %c0_24 = arith.constant 0 : index
    %c0_25 = arith.constant 0 : index
    %c0_26 = arith.constant 0 : index
    %43 = vector.load %arg7[%c0_23, %c0_24, %c0_25, %c0_26] : memref<1x16x16x128xf32, #tpu.memory_space<vmem>>, vector<1x16x16x128xf32>
    tpu.vector_store %arg7[%c0_23, %c0_24, %c0_25, %c0_26], %42 {strides = array<i32>} : memref<1x16x16x128xf32, #tpu.memory_space<vmem>>, vector<1x16x16x128xf32>,
    return
  }
  func.func @transform_0(%arg0: i32, %arg1: i32, %arg2: i32) -> (i32, i32, i32, i32) {
    %c0_i32 = arith.constant 0 : i32
    %c0_i32_0 = arith.constant 0 : i32
    %c0_i32_1 = arith.constant 0 : i32
    %c0_i32_2 = arith.constant 0 : i32
    return %arg0, %c0_i32, %c0_i32_0, %c0_i32_1 : i32, i32, i32, i32
  }
  func.func @transform_1(%arg0: i32, %arg1: i32, %arg2: i32) -> (i32, i32, i32) {
    %c0_i32 = arith.constant 0 : i32
    %c0_i32_0 = arith.constant 0 : i32
    %c0_i32_1 = arith.constant 0 : i32
    return %c0_i32, %c0_i32_0, %arg2 : i32, i32, i32
  }
  func.func @transform_2(%arg0: i32, %arg1: i32, %arg2: i32) -> (i32, i32) {
    %c0_i32 = arith.constant 0 : i32
    %c0_i32_0 = arith.constant 0 : i32
    return %c0_i32, %arg2 : i32, i32
  }
  func.func @transform_3(%arg0: i32, %arg1: i32, %arg2: i32) -> (i32, i32) {
    %c0_i32 = arith.constant 0 : i32
    %c0_i32_0 = arith.constant 0 : i32
    return %c0_i32, %arg2 : i32, i32
  }
  func.func @transform_4(%arg0: i32, %arg1: i32, %arg2: i32) -> (i32, i32, i32, i32) {
    %c0_i32 = arith.constant 0 : i32
    %c0_i32_0 = arith.constant 0 : i32
    return %arg0, %arg1, %c0_i32, %arg2 : i32, i32, i32, i32
  }
}

</mosaic_0001>

<llo_original>
// kernel: base_conv_forward.1
$region0: #{base_conv_forward.1}
  #allocation0 [shape = 'u32[]', space=smem, size = 0x4, offset = 0x4, fixed_abs, tag = 'smem constant byte address 0x4 - core index']
  #allocation1 [shape = 'u32[144,128]{1,0:T(1,128)}', space=vmem, size = 0x12000, scoped, tag = 'internal scratch']
  %s0 = inlined_call_operand.vmem [shape: bf16[2,18,16,24], index: 0, kind: input, shape index: {}]
  %s1 = inlined_call_operand.vmem [shape: bf16[3,24,128], index: 1, kind: input, shape index: {}]
  %s2 = inlined_call_operand.vmem [shape: f32[1,128], index: 2, kind: input, shape index: {}]
  %s3 = inlined_call_operand.vmem [shape: f32[1,128], index: 3, kind: input, shape index: {}]
  %s4 = inlined_call_operand.vmem [shape: f32[2,16,16,128], index: 4, kind: output, shape index: {}]
  %s5 = sld [smem:[#allocation0]]
  $region49: #{base_conv_forward.1} parent=0
    _
  %s7 = ssub.s32 1, %s5
  %s8 = scalar_select 0, %s7, %s5
  loop: start=0, step=1, limit=4
  $region2: #{base_conv_forward.1} parent=0 // loop_pre_header
    _
  $region3: #{base_conv_forward.1} parent=0 // loop_header
    %s10 = sphi 0, %s14
    %p11 = scmp.ge.s32.totalorder %s10, 4
    %s17 = sphi 0, %s36
    %s18 = sphi 0, %s32
    %s19 = sphi 0, %s28
    %s20 = sphi 0, %s17
    %s21 = sphi 0, %s18
    %s22 = sphi 0, %s19
    %s23 = sphi 0, %s20
    %s24 = sphi 0, %s21
    %s25 = sphi 0, %s22
    %s39 = sphi 0, %s41
    %s42 = sphi 0, %s39
    %s43 = sphi 0, %s42
    %s59 = sphi 0, %s43
    %s65 = sphi 0, %s67
    %s68 = sphi 0, %s65
    %s69 = sphi 0, %s68
    %s85 = sphi 0, %s69
    %s91 = sphi 0, %s93
    %s94 = sphi 0, %s91
    %s95 = sphi 0, %s94
    %s111 = sphi 0, %s95
    %s117 = sphi 0, %s119
    %s120 = sphi 0, %s117
    %s121 = sphi 0, %s120
    %s137 = sphi 0, %s121
    %s147 = sphi 0, %s149
    %s150 = sphi 0, %s147
    %s151 = sphi 0, %s150
    %s167 = sphi 0, %s151
  $region4: #{base_conv_forward.1} parent=0 // loop_header_branch
    %13 = sbr.rel (%p11) target = $region8
  $region5: #{base_conv_forward.1} parent=0 // loop_body
    %s15 = ssub.s32 %s10, 1
    %s16 = ssub.s32 %s10, 2
    %s26 = sadd.s32 1, %s19
    %p27 = scmp.ge.s32.totalorder %s26, 1
    %s28 = scalar_select %p27, 0, %s26
    %s29 = sadd.s32 1, %s18
    %s30 = scalar_select %p27, %s29, %s18
    %p31 = scmp.ge.s32.totalorder %s30, 1
    %s32 = scalar_select %p31, 0, %s30
    %s33 = sadd.s32 1, %s17
    %s34 = scalar_select %p31, %s33, %s17
    %p35 = scmp.ge.s32.totalorder %s34, 2
    %s36 = scalar_select %p35, 0, %s34
    %s37 = ssub.s32 %s17, %s36
    %p38 = scmp.eq.s32.totalorder %s37, 0
    %s40 = sadd.s32 %s39, 1
    %s41 = scalar_select %p38, %s39, %s40
    %p44 = pneg %p38
    %p45 = scmp.eq.s32.totalorder %s10, 1
    %p46 = por %p44, %p45
    %p47 = scmp.ne.s32.totalorder %s39, %s42
    %p48 = scmp.eq.s32.totalorder %s10, 0
    %p49 = por %p47, %p48
    %p50 = scmp.ne.s32.totalorder %s39, %s42
    %p51 = scmp.eq.s32.totalorder %s15, 1
    %p52 = por %p50, %p51
    %p53 = scmp.ne.s32.totalorder %s42, %s43
    %p54 = scmp.eq.s32.totalorder %s15, 0
    %p55 = por %p53, %p54
    %p56 = scmp.ne.s32.totalorder %s42, %s43
    %p57 = scmp.eq.s32.totalorder %s16, 1
    %p58 = por %p56, %p57
    %p60 = scmp.ne.s32.totalorder %s43, %s59
    %p61 = scmp.eq.s32.totalorder %s16, 0
    %p62 = por %p60, %p61
    %s63 = ssub.s32 %s19, %s28
    %p64 = scmp.eq.s32.totalorder %s63, 0
    %s66 = sadd.s32 %s65, 1
    %s67 = scalar_select %p64, %s65, %s66
    %p70 = pneg %p64
    %p71 = scmp.eq.s32.totalorder %s10, 1
    %p72 = por %p70, %p71
    %p73 = scmp.ne.s32.totalorder %s65, %s68
    %p74 = scmp.eq.s32.totalorder %s10, 0
    %p75 = por %p73, %p74
    %p76 = scmp.ne.s32.totalorder %s65, %s68
    %p77 = scmp.eq.s32.totalorder %s15, 1
    %p78 = por %p76, %p77
    %p79 = scmp.ne.s32.totalorder %s68, %s69
    %p80 = scmp.eq.s32.totalorder %s15, 0
    %p81 = por %p79, %p80
    %p82 = scmp.ne.s32.totalorder %s68, %s69
    %p83 = scmp.eq.s32.totalorder %s16, 1
    %p84 = por %p82, %p83
    %p86 = scmp.ne.s32.totalorder %s69, %s85
    %p87 = scmp.eq.s32.totalorder %s16, 0
    %p88 = por %p86, %p87
    %s89 = ssub.s32 %s19, %s28
    %p90 = scmp.eq.s32.totalorder %s89, 0
    %s92 = sadd.s32 %s91, 1
    %s93 = scalar_select %p90, %s91, %s92
    %p96 = pneg %p90
    %p97 = scmp.eq.s32.totalorder %s10, 1
    %p98 = por %p96, %p97
    %p99 = scmp.ne.s32.totalorder %s91, %s94
    %p100 = scmp.eq.s32.totalorder %s10, 0
    %p101 = por %p99, %p100
    %p102 = scmp.ne.s32.totalorder %s91, %s94
    %p103 = scmp.eq.s32.totalorder %s15, 1
    %p104 = por %p102, %p103
    %p105 = scmp.ne.s32.totalorder %s94, %s95
    %p106 = scmp.eq.s32.totalorder %s15, 0
    %p107 = por %p105, %p106
    %p108 = scmp.ne.s32.totalorder %s94, %s95
    %p109 = scmp.eq.s32.totalorder %s16, 1
    %p110 = por %p108, %p109
    %p112 = scmp.ne.s32.totalorder %s95, %s111
    %p113 = scmp.eq.s32.totalorder %s16, 0
    %p114 = por %p112, %p113
    %s115 = ssub.s32 %s19, %s28
    %p116 = scmp.eq.s32.totalorder %s115, 0
    %s118 = sadd.s32 %s117, 1
    %s119 = scalar_select %p116, %s117, %s118
    %p122 = pneg %p116
    %p123 = scmp.eq.s32.totalorder %s10, 1
    %p124 = por %p122, %p123
    %p125 = scmp.ne.s32.totalorder %s117, %s120
    %p126 = scmp.eq.s32.totalorder %s10, 0
    %p127 = por %p125, %p126
    %p128 = scmp.ne.s32.totalorder %s117, %s120
    %p129 = scmp.eq.s32.totalorder %s15, 1
    %p130 = por %p128, %p129
    %p131 = scmp.ne.s32.totalorder %s120, %s121
    %p132 = scmp.eq.s32.totalorder %s15, 0
    %p133 = por %p131, %p132
    %p134 = scmp.ne.s32.totalorder %s120, %s121
    %p135 = scmp.eq.s32.totalorder %s16, 1
    %p136 = por %p134, %p135
    %p138 = scmp.ne.s32.totalorder %s121, %s137
    %p139 = scmp.eq.s32.totalorder %s16, 0
    %p140 = por %p138, %p139
    %s141 = ssub.s32 %s17, %s36
    %s142 = ssub.s32 %s18, %s32
    %s143 = sor.u32 %s141, %s142
    %s144 = ssub.s32 %s19, %s28
    %s145 = sor.u32 %s143, %s144
    %p146 = scmp.eq.s32.totalorder %s145, 0
    %s148 = sadd.s32 %s147, 1
    %s149 = scalar_select %p146, %s147, %s148
    %p152 = pneg %p146
    %p153 = scmp.eq.s32.totalorder %s10, 1
    %p154 = por %p152, %p153
    %p155 = scmp.ne.s32.totalorder %s147, %s150
    %p156 = scmp.eq.s32.totalorder %s10, 0
    %p157 = por %p155, %p156
    %p158 = scmp.ne.s32.totalorder %s147, %s150
    %p159 = scmp.eq.s32.totalorder %s15, 1
    %p160 = por %p158, %p159
    %p161 = scmp.ne.s32.totalorder %s150, %s151
    %p162 = scmp.eq.s32.totalorder %s15, 0
    %p163 = por %p161, %p162
    %p164 = scmp.ne.s32.totalorder %s150, %s151
    %p165 = scmp.eq.s32.totalorder %s16, 1
    %p166 = por %p164, %p165
    %p168 = scmp.ne.s32.totalorder %s151, %s167
    %p169 = scmp.eq.s32.totalorder %s16, 0
    %p170 = por %p168, %p169
    %p171 = scmp.le.s32.totalorder 1, %s10
    %p172 = scmp.lt.s32.totalorder %s10, 3
    %p173 = pnand %p171, %p172
    %p174 = pneg %p173
    // Predicated region
    $region9: #{base_conv_forward.1} parent=5 // pred_check
      _
    $region10: #{base_conv_forward.1} parent=5 // pred_check_branch
      %176 = sbr.rel (%p173) target = $region12
    $region11: #{base_conv_forward.1} parent=5 // pred_region
      %s177 = ssub.s32 %s10, 1
      // Predicated region
      $region13: #{base_conv_forward.1} parent=11 // pred_check
        %p178 = pneg %p81
      $region14: #{base_conv_forward.1} parent=11 // pred_check_branch
        %180 = sbr.rel (%p178) target = $region16
      $region15: #{base_conv_forward.1} parent=11 // pred_region
        %p181 = scmp.lt.s32.totalorder %s22, 0
        %s182 = scalar_select %p181, %s22, 0
        %s183 = smul.addr %s182, 4
        %s184 = scalar_lea.vmem %s1, %s183
      $region16: #{base_conv_forward.1} parent=11 // pred_fallthru
        _
      // Predicated region
      $region17: #{base_conv_forward.1} parent=11 // pred_check
        %p185 = pneg %p107
      $region18: #{base_conv_forward.1} parent=11 // pred_check_branch
        %187 = sbr.rel (%p185) target = $region20
      $region19: #{base_conv_forward.1} parent=11 // pred_region
        %p188 = scmp.lt.s32.totalorder %s22, 0
        %s189 = scalar_select %p188, %s22, 0
        %s190 = scalar_lea.vmem %s2, %s189
      $region20: #{base_conv_forward.1} parent=11 // pred_fallthru
        _
      // Predicated region
      $region21: #{base_conv_forward.1} parent=11 // pred_check
        %p191 = pneg %p133
      $region22: #{base_conv_forward.1} parent=11 // pred_check_branch
        %193 = sbr.rel (%p191) target = $region24
      $region23: #{base_conv_forward.1} parent=11 // pred_region
        %p194 = scmp.lt.s32.totalorder %s22, 0
        %s195 = scalar_select %p194, %s22, 0
        %s196 = scalar_lea.vmem %s3, %s195
      $region24: #{base_conv_forward.1} parent=11 // pred_fallthru
        _
    $region12: #{base_conv_forward.1} parent=5 // pred_fallthru
      _
    %p197 = scmp.lt.s32.totalorder %s10, 2
    // Predicated region
    $region25: #{base_conv_forward.1} parent=5 // pred_check
      %p198 = pneg %p197
    $region26: #{base_conv_forward.1} parent=5 // pred_check_branch
      %200 = sbr.rel (%p198) target = $region28
    $region27: #{base_conv_forward.1} parent=5 // pred_region
      // Predicated region
      $region29: #{base_conv_forward.1} parent=27 // pred_check
        %p201 = pneg %p49
      $region30: #{base_conv_forward.1} parent=27 // pred_check_branch
        %203 = sbr.rel (%p201) target = $region32
      $region31: #{base_conv_forward.1} parent=27 // pred_region
        %p204 = scmp.lt.s32.totalorder %s17, 1
        %s205 = scalar_select %p204, %s17, 1
        %s206 = smul.addr %s205, 36
        %s207 = smul.addr %s206, 4
        %s208 = scalar_lea.vmem %s0, %s207
      $region32: #{base_conv_forward.1} parent=27 // pred_fallthru
        _
    $region28: #{base_conv_forward.1} parent=5 // pred_fallthru
      _
    %p209 = scmp.le.s32.totalorder 1, %s10
    %p210 = scmp.lt.s32.totalorder %s10, 3
    %p211 = pnand %p209, %p210
    %p212 = pneg %p211
    // Predicated region
    $region33: #{base_conv_forward.1} parent=5 // pred_check
      _
    $region34: #{base_conv_forward.1} parent=5 // pred_check_branch
      %214 = sbr.rel (%p211) target = $region36
    $region35: #{base_conv_forward.1} parent=5 // pred_region
      %s215 = ssub.s32 %s10, 1
      %p216 = scmp.lt.s32.totalorder %s20, 1
      %s217 = scalar_select %p216, %s20, 1
      %s218 = smul.addr %s217, 36
      %s219 = smul.addr %s218, 4
      %s220 = scalar_lea.vmem %s0, %s219
      %p221 = pneg %p55
      %p222 = pneg %p52
      %p223 = scmp.lt.s32.totalorder %s22, 0
      %s224 = scalar_select %p223, %s22, 0
      %s225 = smul.addr %s224, 4
      %s226 = scalar_lea.vmem %s1, %s225
      %p227 = pneg %p81
      %p228 = pneg %p78
      %p229 = scmp.lt.s32.totalorder %s22, 0
      %s230 = scalar_select %p229, %s22, 0
      %s231 = scalar_lea.vmem %s2, %s230
      %p232 = pneg %p107
      %p233 = pneg %p104
      %p234 = scmp.lt.s32.totalorder %s22, 0
      %s235 = scalar_select %p234, %s22, 0
      %s236 = scalar_lea.vmem %s3, %s235
      %p237 = pneg %p133
      %p238 = pneg %p130
      %p239 = pneg %p163
      %p240 = pneg %p160
      %s241 = smul.u32 16, %s21
      %p242 = scmp.lt.s32.totalorder %s20, 1
      %s243 = scalar_select %p242, %s20, 1
      %p244 = scmp.lt.s32.totalorder %s241, 15
      %s245 = scalar_select %p244, %s241, 15
      %p246 = scmp.lt.s32.totalorder %s22, 0
      %s247 = scalar_select %p246, %s22, 0
      %s248 = smul.addr %s245, 2
      %s249 = sadd.s32 %s247, %s248
      %s250 = smul.addr %s243, 32
      %s251 = sadd.s32 %s249, %s250
      %s252 = smul.addr %s251, 8
      %s253 = scalar_lea.vmem %s4, %s252
      %p254 = scmp.lt.s32.totalorder %s20, 1
      %s255 = scalar_select %p254, %s20, 1
      %s256 = smul.addr %s255, 36
      %s257 = smul.addr %s256, 4
      %s258 = scalar_lea.vmem %s0, %s257
      %p259 = scmp.lt.s32.totalorder %s22, 0
      %s260 = scalar_select %p259, %s22, 0
      %s261 = smul.addr %s260, 4
      %s262 = scalar_lea.vmem %s1, %s261
      %p263 = scmp.lt.s32.totalorder %s22, 0
      %s264 = scalar_select %p263, %s22, 0
      %s265 = scalar_lea.vmem %s2, %s264
      %p266 = scmp.lt.s32.totalorder %s22, 0
      %s267 = scalar_select %p266, %s22, 0
      %s268 = scalar_lea.vmem %s3, %s267
      %s269 = smul.u32 16, %s21
      %p270 = scmp.lt.s32.totalorder %s20, 1
      %s271 = scalar_select %p270, %s20, 1
      %p272 = scmp.lt.s32.totalorder %s269, 15
      %s273 = scalar_select %p272, %s269, 15
      %p274 = scmp.lt.s32.totalorder %s22, 0
      %s275 = scalar_select %p274, %s22, 0
      %s276 = smul.addr %s273, 2
      %s277 = sadd.s32 %s275, %s276
      %s278 = smul.addr %s271, 32
      %s279 = sadd.s32 %s277, %s278
      %s280 = smul.addr %s279, 8
      %s281 = scalar_lea.vmem %s4, %s280
      %s282 = smul.u32 16, %s21
      %s284 = smul.u32 %s21, 16
      %s285 = smul.u32 %s284, 2
      %s286 = smul.addr %s285, 4
      %s287 = scalar_lea.vmem %s258, %s286
      %v288 = vld [vmem:[%s287] sm:$0xf]
      %v289 = vld [vmem:[%s287 + $0x4] sm:$0xf]
      %v290 = vld [vmem:[%s287 + $0x8] sm:$0xf]
      %v291 = vld [vmem:[%s287 + $0xc] sm:$0xf]
      %v292 = vld [vmem:[%s287 + $0x10] sm:$0xf]
      %v293 = vld [vmem:[%s287 + $0x14] sm:$0xf]
      %v294 = vld [vmem:[%s287 + $0x18] sm:$0xf]
      %v295 = vld [vmem:[%s287 + $0x1c] sm:$0xf]
      %v296 = vld [vmem:[%s287 + $0x20] sm:$0xf]
      %v297 = vld [vmem:[%s287 + $0x24] sm:$0xf]
      %v298 = vld [vmem:[%s287 + $0x28] sm:$0xf]
      %v299 = vld [vmem:[%s287 + $0x2c] sm:$0xf]
      %v300 = vld [vmem:[%s287 + $0x30] sm:$0xf]
      %v301 = vld [vmem:[%s287 + $0x34] sm:$0xf]
      %v302 = vld [vmem:[%s287 + $0x38] sm:$0xf]
      %v303 = vld [vmem:[%s287 + $0x3c] sm:$0xf]
      %v304 = vld [vmem:[%s287 + $0x40] sm:$0xf]
      %v305 = vld [vmem:[%s287 + $0x44] sm:$0xf]
      %v306 = vld [vmem:[%s287 + $0x48] sm:$0xf]
      %v307 = vld [vmem:[%s287 + $0x4c] sm:$0xf]
      %v308 = vld [vmem:[%s287 + $0x50] sm:$0xf]
      %v309 = vld [vmem:[%s287 + $0x54] sm:$0xf]
      %v310 = vld [vmem:[%s287 + $0x58] sm:$0xf]
      %v311 = vld [vmem:[%s287 + $0x5c] sm:$0xf]
      %v312 = vld [vmem:[%s287 + $0x60] sm:$0xf]
      %v313 = vld [vmem:[%s287 + $0x64] sm:$0xf]
      %v314 = vld [vmem:[%s287 + $0x68] sm:$0xf]
      %v315 = vld [vmem:[%s287 + $0x6c] sm:$0xf]
      %v316 = vld [vmem:[%s287 + $0x70] sm:$0xf]
      %v317 = vld [vmem:[%s287 + $0x74] sm:$0xf]
      %v318 = vld [vmem:[%s287 + $0x78] sm:$0xf]
      %v319 = vld [vmem:[%s287 + $0x7c] sm:$0xf]
      %v320 = vld [vmem:[%s262] sm:$0xf]
      %v321 = vld [vmem:[%s262 + $0x4] sm:$0xf]
      %v322 = vld [vmem:[%s262 + $0x8] sm:$0xf]
      %s323 = sadd.s32 %s284, 1
      %s324 = smul.u32 %s323, 2
      %s325 = smul.addr %s324, 4
      %s326 = scalar_lea.vmem %s258, %s325
      %v327 = vld [vmem:[%s326] sm:$0xf]
      %v328 = vld [vmem:[%s326 + $0x4] sm:$0xf]
      %v329 = vld [vmem:[%s326 + $0x8] sm:$0xf]
      %v330 = vld [vmem:[%s326 + $0xc] sm:$0xf]
      %v331 = vld [vmem:[%s326 + $0x10] sm:$0xf]
      %v332 = vld [vmem:[%s326 + $0x14] sm:$0xf]
      %v333 = vld [vmem:[%s326 + $0x18] sm:$0xf]
      %v334 = vld [vmem:[%s326 + $0x1c] sm:$0xf]
      %v335 = vld [vmem:[%s326 + $0x20] sm:$0xf]
      %v336 = vld [vmem:[%s326 + $0x24] sm:$0xf]
      %v337 = vld [vmem:[%s326 + $0x28] sm:$0xf]
      %v338 = vld [vmem:[%s326 + $0x2c] sm:$0xf]
      %v339 = vld [vmem:[%s326 + $0x30] sm:$0xf]
      %v340 = vld [vmem:[%s326 + $0x34] sm:$0xf]
      %v341 = vld [vmem:[%s326 + $0x38] sm:$0xf]
      %v342 = vld [vmem:[%s326 + $0x3c] sm:$0xf]
      %v343 = vld [vmem:[%s326 + $0x40] sm:$0xf]
      %v344 = vld [vmem:[%s326 + $0x44] sm:$0xf]
      %v345 = vld [vmem:[%s326 + $0x48] sm:$0xf]
      %v346 = vld [vmem:[%s326 + $0x4c] sm:$0xf]
      %v347 = vld [vmem:[%s326 + $0x50] sm:$0xf]
      %v348 = vld [vmem:[%s326 + $0x54] sm:$0xf]
      %v349 = vld [vmem:[%s326 + $0x58] sm:$0xf]
      %v350 = vld [vmem:[%s326 + $0x5c] sm:$0xf]
      %v351 = vld [vmem:[%s326 + $0x60] sm:$0xf]
      %v352 = vld [vmem:[%s326 + $0x64] sm:$0xf]
      %v353 = vld [vmem:[%s326 + $0x68] sm:$0xf]
      %v354 = vld [vmem:[%s326 + $0x6c] sm:$0xf]
      %v355 = vld [vmem:[%s326 + $0x70] sm:$0xf]
      %v356 = vld [vmem:[%s326 + $0x74] sm:$0xf]
      %v357 = vld [vmem:[%s326 + $0x78] sm:$0xf]
      %v358 = vld [vmem:[%s326 + $0x7c] sm:$0xf]
      %s359 = scalar_lea.vmem %s262, 12
      %v360 = vld [vmem:[%s359] sm:$0xf]
      %v361 = vld [vmem:[%s359 + $0x4] sm:$0xf]
      %v362 = vld [vmem:[%s359 + $0x8] sm:$0xf]
      %v395 = vunpack.c.l.b16 %v327
      %v396 = vunpack.c.l.b16 %v328
      %v397 = vunpack.c.l.b16 %v329
      %v398 = vunpack.c.l.b16 %v330
      %v399 = vunpack.c.l.b16 %v331
      %v400 = vunpack.c.l.b16 %v332
      %v401 = vunpack.c.l.b16 %v333
      %v402 = vunpack.c.l.b16 %v334
      %v403 = vunpack.c.l.b16 %v335
      %v404 = vunpack.c.l.b16 %v336
      %v405 = vunpack.c.l.b16 %v337
      %v406 = vunpack.c.l.b16 %v338
      %v407 = vunpack.c.l.b16 %v339
      %v408 = vunpack.c.l.b16 %v340
      %v409 = vunpack.c.l.b16 %v341
      %v410 = vunpack.c.l.b16 %v342
      %v411 = vunpack.c.l.b16 %v343
      %v412 = vunpack.c.l.b16 %v344
      %v413 = vunpack.c.l.b16 %v345
      %v414 = vunpack.c.l.b16 %v346
      %v415 = vunpack.c.l.b16 %v347
      %v416 = vunpack.c.l.b16 %v348
      %v417 = vunpack.c.l.b16 %v349
      %v418 = vunpack.c.l.b16 %v350
      %v419 = vunpack.c.l.b16 %v351
      %v420 = vunpack.c.l.b16 %v352
      %v421 = vunpack.c.l.b16 %v353
      %v422 = vunpack.c.l.b16 %v354
      %v423 = vunpack.c.l.b16 %v355
      %v424 = vunpack.c.l.b16 %v356
      %v425 = vunpack.c.l.b16 %v357
      %v426 = vunpack.c.l.b16 %v358
      %v427 = vpack.c.b16 %v396, %v395
      %v428 = vpack.c.b16 %v398, %v397
      %v429 = vpack.c.b16 %v400, %v399
      %v430 = vpack.c.b16 %v402, %v401
      %v431 = vpack.c.b16 %v404, %v403
      %v432 = vpack.c.b16 %v406, %v405
      %v433 = vpack.c.b16 %v408, %v407
      %v434 = vpack.c.b16 %v410, %v409
      %v435 = vpack.c.b16 %v412, %v411
      %v436 = vpack.c.b16 %v414, %v413
      %v437 = vpack.c.b16 %v416, %v415
      %v438 = vpack.c.b16 %v418, %v417
      %v439 = vpack.c.b16 %v420, %v419
      %v440 = vpack.c.b16 %v422, %v421
      %v441 = vpack.c.b16 %v424, %v423
      %v442 = vpack.c.b16 %v426, %v425
      %v446 = vunpack.c.l.b16 %v360
      %v447 = vunpack.c.l.b16 %v361
      %v448 = vunpack.c.l.b16 %v362
      %v449 = vpack.c.b16 %v447, %v446
      %v450 = vpack.c.b16 %v448, %v448
      %vm452 = vcmask 195584
      %v454 = vsel %vm452, %v427, 0
      %v457 = vsel %vm452, %v428, 0
      %v460 = vsel %vm452, %v429, 0
      %v463 = vsel %vm452, %v430, 0
      %v466 = vsel %vm452, %v431, 0
      %v469 = vsel %vm452, %v432, 0
      %v472 = vsel %vm452, %v433, 0
      %v475 = vsel %vm452, %v434, 0
      %v478 = vsel %vm452, %v435, 0
      %v481 = vsel %vm452, %v436, 0
      %v484 = vsel %vm452, %v437, 0
      %v487 = vsel %vm452, %v438, 0
      %v490 = vsel %vm452, %v439, 0
      %v493 = vsel %vm452, %v440, 0
      %v496 = vsel %vm452, %v441, 0
      %v499 = vsel %vm452, %v442, 0
      %vm501 = vcmask 1043456
      %v503 = vsel %vm501, %v450, 0
      %505 = vmatprep.subr.bf16.mxu0 0
      %506 = vmatpush1.bf16.msra.mxu0 %v449
      %507 = vmatprep.subr.bf16.mxu0 0
      %508 = vmatpush1.bf16.msra.mxu0 %v503
      %509 = vmatprep.subr.bf16.mxu0 0
      %510 = vmatpush1.bf16.msra.mxu0 0
      %511 = vmatprep.subr.bf16.mxu0 0
      %512 = vmatpush1.bf16.msra.mxu0 0
      %513 = vmatprep.subr.bf16.mxu0 0
      %514 = vmatpush1.bf16.msra.mxu0 0
      %515 = vmatprep.subr.bf16.mxu0 0
      %516 = vmatpush1.bf16.msra.mxu0 0
      %517 = vmatprep.subr.bf16.mxu0 0
      %518 = vmatpush1.bf16.msra.mxu0 0
      %519 = vmatprep.subr.bf16.mxu0 0
      %520 = vmatpush1.bf16.msra.mxu0 0
      %521 = vmatprep.subr.bf16.mxu0 0
      %522 = vmatpush1.bf16.msra.mxu0 0
      %523 = vmatprep.subr.bf16.mxu0 0
      %524 = vmatpush1.bf16.msra.mxu0 0
      %525 = vmatprep.subr.bf16.mxu0 0
      %526 = vmatpush1.bf16.msra.mxu0 0
      %527 = vmatprep.subr.bf16.mxu0 0
      %528 = vmatpush1.bf16.msra.mxu0 0
      %529 = vmatprep.subr.bf16.mxu0 0
      %530 = vmatpush1.bf16.msra.mxu0 0
      %531 = vmatprep.subr.bf16.mxu0 0
      %532 = vmatpush1.bf16.msra.mxu0 0
      %533 = vmatprep.subr.bf16.mxu0 0
      %534 = vmatpush1.bf16.msra.mxu0 0
      %535 = vmatprep.subr.bf16.mxu0 0
      %536 = vmatpush1.bf16.msra.mxu0 0
      %537 = vmatprep.mubr.bf16.mxu0 0
      %538 = vmatmul.mubr.bf16.gmra.mrb[0].mxu0 %v454
      %v539 = vpop.f32.mrb[0].mxu0
      %v540 = vadd.f32 0.0, %v539
      %v541 = vpop.f32.mrb[0].mxu0
      %v542 = vpop.f32.mrb[0].mxu0
      %v543 = vadd.f32 0.0, %v542
      %v544 = vpop.f32.mrb[0].mxu0
      %545 = vmatprep.mubr.bf16.mxu0 0
      %546 = vmatmul.mubr.bf16.gmra.mrb[0].mxu0 %v457
      %v547 = vpop.f32.mrb[0].mxu0
      %v548 = vadd.f32 0.0, %v547
      %v549 = vpop.f32.mrb[0].mxu0
      %v550 = vpop.f32.mrb[0].mxu0
      %v551 = vadd.f32 0.0, %v550
      %v552 = vpop.f32.mrb[0].mxu0
      %553 = vmatprep.mubr.bf16.mxu0 0
      %554 = vmatmul.mubr.bf16.gmra.mrb[0].mxu0 %v460
      %v555 = vpop.f32.mrb[0].mxu0
      %v556 = vadd.f32 0.0, %v555
      %v557 = vpop.f32.mrb[0].mxu0
      %v558 = vpop.f32.mrb[0].mxu0
      %v559 = vadd.f32 0.0, %v558
      %v560 = vpop.f32.mrb[0].mxu0
      %561 = vmatprep.mubr.bf16.mxu0 0
      %562 = vmatmul.mubr.bf16.gmra.mrb[0].mxu0 %v463
      %v563 = vpop.f32.mrb[0].mxu0
      %v564 = vadd.f32 0.0, %v563
      %v565 = vpop.f32.mrb[0].mxu0
      %v566 = vpop.f32.mrb[0].mxu0
      %v567 = vadd.f32 0.0, %v566
      %v568 = vpop.f32.mrb[0].mxu0
      %569 = vmatprep.mubr.bf16.mxu0 0
      %570 = vmatmul.mubr.bf16.gmra.mrb[0].mxu0 %v466
      %v571 = vpop.f32.mrb[0].mxu0
      %v572 = vadd.f32 0.0, %v571
      %v573 = vpop.f32.mrb[0].mxu0
      %v574 = vpop.f32.mrb[0].mxu0
      %v575 = vadd.f32 0.0, %v574
      %v576 = vpop.f32.mrb[0].mxu0
      %577 = vmatprep.mubr.bf16.mxu0 0
      %578 = vmatmul.mubr.bf16.gmra.mrb[0].mxu0 %v469
      %v579 = vpop.f32.mrb[0].mxu0
      %v580 = vadd.f32 0.0, %v579
      %v581 = vpop.f32.mrb[0].mxu0
      %v582 = vpop.f32.mrb[0].mxu0
      %v583 = vadd.f32 0.0, %v582
      %v584 = vpop.f32.mrb[0].mxu0
      %585 = vmatprep.mubr.bf16.mxu0 0
      %586 = vmatmul.mubr.bf16.gmra.mrb[0].mxu0 %v472
      %v587 = vpop.f32.mrb[0].mxu0
      %v588 = vadd.f32 0.0, %v587
      %v589 = vpop.f32.mrb[0].mxu0
      %v590 = vpop.f32.mrb[0].mxu0
      %v591 = vadd.f32 0.0, %v590
      %v592 = vpop.f32.mrb[0].mxu0
      %593 = vmatprep.mubr.bf16.mxu0 0
      %594 = vmatmul.mubr.bf16.gmra.mrb[0].mxu0 %v475
      %v595 = vpop.f32.mrb[0].mxu0
      %v596 = vadd.f32 0.0, %v595
      %v597 = vpop.f32.mrb[0].mxu0
      %v598 = vpop.f32.mrb[0].mxu0
      %v599 = vadd.f32 0.0, %v598
      %v600 = vpop.f32.mrb[0].mxu0
      %601 = vmatprep.mubr.bf16.mxu0 0
      %602 = vmatmul.mubr.bf16.gmra.mrb[0].mxu0 %v478
      %v603 = vpop.f32.mrb[0].mxu0
      %v604 = vadd.f32 0.0, %v603
      %v605 = vpop.f32.mrb[0].mxu0
      %v606 = vpop.f32.mrb[0].mxu0
      %v607 = vadd.f32 0.0, %v606
      %v608 = vpop.f32.mrb[0].mxu0
      %609 = vmatprep.mubr.bf16.mxu0 0
      %610 = vmatmul.mubr.bf16.gmra.mrb[0].mxu0 %v481
      %v611 = vpop.f32.mrb[0].mxu0
      %v612 = vadd.f32 0.0, %v611
      %v613 = vpop.f32.mrb[0].mxu0
      %v614 = vpop.f32.mrb[0].mxu0
      %v615 = vadd.f32 0.0, %v614
      %v616 = vpop.f32.mrb[0].mxu0
      %617 = vmatprep.mubr.bf16.mxu0 0
      %618 = vmatmul.mubr.bf16.gmra.mrb[0].mxu0 %v484
      %v619 = vpop.f32.mrb[0].mxu0
      %v620 = vadd.f32 0.0, %v619
      %v621 = vpop.f32.mrb[0].mxu0
      %v622 = vpop.f32.mrb[0].mxu0
      %v623 = vadd.f32 0.0, %v622
      %v624 = vpop.f32.mrb[0].mxu0
      %625 = vmatprep.mubr.bf16.mxu0 0
      %626 = vmatmul.mubr.bf16.gmra.mrb[0].mxu0 %v487
      %v627 = vpop.f32.mrb[0].mxu0
      %v628 = vadd.f32 0.0, %v627
      %v629 = vpop.f32.mrb[0].mxu0
      %v630 = vpop.f32.mrb[0].mxu0
      %v631 = vadd.f32 0.0, %v630
      %v632 = vpop.f32.mrb[0].mxu0
      %633 = vmatprep.mubr.bf16.mxu0 0
      %634 = vmatmul.mubr.bf16.gmra.mrb[0].mxu0 %v490
      %v635 = vpop.f32.mrb[0].mxu0
      %v636 = vadd.f32 0.0, %v635
      %v637 = vpop.f32.mrb[0].mxu0
      %v638 = vpop.f32.mrb[0].mxu0
      %v639 = vadd.f32 0.0, %v638
      %v640 = vpop.f32.mrb[0].mxu0
      %641 = vmatprep.mubr.bf16.mxu0 0
      %642 = vmatmul.mubr.bf16.gmra.mrb[0].mxu0 %v493
      %v643 = vpop.f32.mrb[0].mxu0
      %v644 = vadd.f32 0.0, %v643
      %v645 = vpop.f32.mrb[0].mxu0
      %v646 = vpop.f32.mrb[0].mxu0
      %v647 = vadd.f32 0.0, %v646
      %v648 = vpop.f32.mrb[0].mxu0
      %649 = vmatprep.mubr.bf16.mxu0 0
      %650 = vmatmul.mubr.bf16.gmra.mrb[0].mxu0 %v496
      %v651 = vpop.f32.mrb[0].mxu0
      %v652 = vadd.f32 0.0, %v651
      %v653 = vpop.f32.mrb[0].mxu0
      %v654 = vpop.f32.mrb[0].mxu0
      %v655 = vadd.f32 0.0, %v654
      %v656 = vpop.f32.mrb[0].mxu0
      %657 = vmatprep.mubr.bf16.mxu0 0
      %658 = vmatmul.mubr.bf16.gmra.mrb[0].mxu0 %v499
      %v659 = vpop.f32.mrb[0].mxu0
      %v660 = vadd.f32 0.0, %v659
      %v661 = vpop.f32.mrb[0].mxu0
      %v662 = vpop.f32.mrb[0].mxu0
      %v663 = vadd.f32 0.0, %v662
      %v664 = vpop.f32.mrb[0].mxu0
      %665 = vdwg.mxu0
      %v698 = vunpack.c.l.b16 %v288
      %v699 = vunpack.c.l.b16 %v289
      %v700 = vunpack.c.l.b16 %v290
      %v701 = vunpack.c.l.b16 %v291
      %v702 = vunpack.c.l.b16 %v292
      %v703 = vunpack.c.l.b16 %v293
      %v704 = vunpack.c.l.b16 %v294
      %v705 = vunpack.c.l.b16 %v295
      %v706 = vunpack.c.l.b16 %v296
      %v707 = vunpack.c.l.b16 %v297
      %v708 = vunpack.c.l.b16 %v298
      %v709 = vunpack.c.l.b16 %v299
      %v710 = vunpack.c.l.b16 %v300
      %v711 = vunpack.c.l.b16 %v301
      %v712 = vunpack.c.l.b16 %v302
      %v713 = vunpack.c.l.b16 %v303
      %v714 = vunpack.c.l.b16 %v304
      %v715 = vunpack.c.l.b16 %v305
      %v716 = vunpack.c.l.b16 %v306
      %v717 = vunpack.c.l.b16 %v307
      %v718 = vunpack.c.l.b16 %v308
      %v719 = vunpack.c.l.b16 %v309
      %v720 = vunpack.c.l.b16 %v310
      %v721 = vunpack.c.l.b16 %v311
      %v722 = vunpack.c.l.b16 %v312
      %v723 = vunpack.c.l.b16 %v313
      %v724 = vunpack.c.l.b16 %v314
      %v725 = vunpack.c.l.b16 %v315
      %v726 = vunpack.c.l.b16 %v316
      %v727 = vunpack.c.l.b16 %v317
      %v728 = vunpack.c.l.b16 %v318
      %v729 = vunpack.c.l.b16 %v319
      %v730 = vpack.c.b16 %v699, %v698
      %v731 = vpack.c.b16 %v701, %v700
      %v732 = vpack.c.b16 %v703, %v702
      %v733 = vpack.c.b16 %v705, %v704
      %v734 = vpack.c.b16 %v707, %v706
      %v735 = vpack.c.b16 %v709, %v708
      %v736 = vpack.c.b16 %v711, %v710
      %v737 = vpack.c.b16 %v713, %v712
      %v738 = vpack.c.b16 %v715, %v714
      %v739 = vpack.c.b16 %v717, %v716
      %v740 = vpack.c.b16 %v719, %v718
      %v741 = vpack.c.b16 %v721, %v720
      %v742 = vpack.c.b16 %v723, %v722
      %v743 = vpack.c.b16 %v725, %v724
      %v744 = vpack.c.b16 %v727, %v726
      %v745 = vpack.c.b16 %v729, %v728
      %v749 = vunpack.c.l.b16 %v320
      %v750 = vunpack.c.l.b16 %v321
      %v751 = vunpack.c.l.b16 %v322
      %v752 = vpack.c.b16 %v750, %v749
      %v753 = vpack.c.b16 %v751, %v751
      %v756 = vsel %vm452, %v730, 0
      %v759 = vsel %vm452, %v731, 0
      %v762 = vsel %vm452, %v732, 0
      %v765 = vsel %vm452, %v733, 0
      %v768 = vsel %vm452, %v734, 0
      %v771 = vsel %vm452, %v735, 0
      %v774 = vsel %vm452, %v736, 0
      %v777 = vsel %vm452, %v737, 0
      %v780 = vsel %vm452, %v738, 0
      %v783 = vsel %vm452, %v739, 0
      %v786 = vsel %vm452, %v740, 0
      %v789 = vsel %vm452, %v741, 0
      %v792 = vsel %vm452, %v742, 0
      %v795 = vsel %vm452, %v743, 0
      %v798 = vsel %vm452, %v744, 0
      %v801 = vsel %vm452, %v745, 0
      %v804 = vsel %vm501, %v753, 0
      %806 = vmatprep.subr.bf16.mxu0 0
      %807 = vmatpush1.bf16.msra.mxu0 %v752
      %808 = vmatprep.subr.bf16.mxu0 0
      %809 = vmatpush1.bf16.msra.mxu0 %v804
      %810 = vmatprep.subr.bf16.mxu0 0
      %811 = vmatpush1.bf16.msra.mxu0 0
      %812 = vmatprep.subr.bf16.mxu0 0
      %813 = vmatpush1.bf16.msra.mxu0 0
      %814 = vmatprep.subr.bf16.mxu0 0
      %815 = vmatpush1.bf16.msra.mxu0 0
      %816 = vmatprep.subr.bf16.mxu0 0
      %817 = vmatpush1.bf16.msra.mxu0 0
      %818 = vmatprep.subr.bf16.mxu0 0
      %819 = vmatpush1.bf16.msra.mxu0 0
      %820 = vmatprep.subr.bf16.mxu0 0
      %821 = vmatpush1.bf16.msra.mxu0 0
      %822 = vmatprep.subr.bf16.mxu0 0
      %823 = vmatpush1.bf16.msra.mxu0 0
      %824 = vmatprep.subr.bf16.mxu0 0
      %825 = vmatpush1.bf16.msra.mxu0 0
      %826 = vmatprep.subr.bf16.mxu0 0
      %827 = vmatpush1.bf16.msra.mxu0 0
      %828 = vmatprep.subr.bf16.mxu0 0
      %829 = vmatpush1.bf16.msra.mxu0 0
      %830 = vmatprep.subr.bf16.mxu0 0
      %831 = vmatpush1.bf16.msra.mxu0 0
      %832 = vmatprep.subr.bf16.mxu0 0
      %833 = vmatpush1.bf16.msra.mxu0 0
      %834 = vmatprep.subr.bf16.mxu0 0
      %835 = vmatpush1.bf16.msra.mxu0 0
      %836 = vmatprep.subr.bf16.mxu0 0
      %837 = vmatpush1.bf16.msra.mxu0 0
      %838 = vmatprep.mubr.bf16.mxu0 0
      %839 = vmatmul.mubr.bf16.gmra.mrb[0].mxu0 %v756
      %v840 = vpop.f32.mrb[0].mxu0
      %v841 = vadd.f32 %v540, %v840
      %v842 = vpop.f32.mrb[0].mxu0
      %v843 = vpop.f32.mrb[0].mxu0
      %v844 = vadd.f32 %v543, %v843
      %v845 = vpop.f32.mrb[0].mxu0
      %846 = vmatprep.mubr.bf16.mxu0 0
      %847 = vmatmul.mubr.bf16.gmra.mrb[0].mxu0 %v759
      %v848 = vpop.f32.mrb[0].mxu0
      %v849 = vadd.f32 %v548, %v848
      %v850 = vpop.f32.mrb[0].mxu0
      %v851 = vpop.f32.mrb[0].mxu0
      %v852 = vadd.f32 %v551, %v851
      %v853 = vpop.f32.mrb[0].mxu0
      %854 = vmatprep.mubr.bf16.mxu0 0
      %855 = vmatmul.mubr.bf16.gmra.mrb[0].mxu0 %v762
      %v856 = vpop.f32.mrb[0].mxu0
      %v857 = vadd.f32 %v556, %v856
      %v858 = vpop.f32.mrb[0].mxu0
      %v859 = vpop.f32.mrb[0].mxu0
      %v860 = vadd.f32 %v559, %v859
      %v861 = vpop.f32.mrb[0].mxu0
      %862 = vmatprep.mubr.bf16.mxu0 0
      %863 = vmatmul.mubr.bf16.gmra.mrb[0].mxu0 %v765
      %v864 = vpop.f32.mrb[0].mxu0
      %v865 = vadd.f32 %v564, %v864
      %v866 = vpop.f32.mrb[0].mxu0
      %v867 = vpop.f32.mrb[0].mxu0
      %v868 = vadd.f32 %v567, %v867
      %v869 = vpop.f32.mrb[0].mxu0
      %870 = vmatprep.mubr.bf16.mxu0 0
      %871 = vmatmul.mubr.bf16.gmra.mrb[0].mxu0 %v768
      %v872 = vpop.f32.mrb[0].mxu0
      %v873 = vadd.f32 %v572, %v872
      %v874 = vpop.f32.mrb[0].mxu0
      %v875 = vpop.f32.mrb[0].mxu0
      %v876 = vadd.f32 %v575, %v875
      %v877 = vpop.f32.mrb[0].mxu0
      %878 = vmatprep.mubr.bf16.mxu0 0
      %879 = vmatmul.mubr.bf16.gmra.mrb[0].mxu0 %v771
      %v880 = vpop.f32.mrb[0].mxu0
      %v881 = vadd.f32 %v580, %v880
      %v882 = vpop.f32.mrb[0].mxu0
      %v883 = vpop.f32.mrb[0].mxu0
      %v884 = vadd.f32 %v583, %v883
      %v885 = vpop.f32.mrb[0].mxu0
      %886 = vmatprep.mubr.bf16.mxu0 0
      %887 = vmatmul.mubr.bf16.gmra.mrb[0].mxu0 %v774
      %v888 = vpop.f32.mrb[0].mxu0
      %v889 = vadd.f32 %v588, %v888
      %v890 = vpop.f32.mrb[0].mxu0
      %v891 = vpop.f32.mrb[0].mxu0
      %v892 = vadd.f32 %v591, %v891
      %v893 = vpop.f32.mrb[0].mxu0
      %894 = vmatprep.mubr.bf16.mxu0 0
      %895 = vmatmul.mubr.bf16.gmra.mrb[0].mxu0 %v777
      %v896 = vpop.f32.mrb[0].mxu0
      %v897 = vadd.f32 %v596, %v896
      %v898 = vpop.f32.mrb[0].mxu0
      %v899 = vpop.f32.mrb[0].mxu0
      %v900 = vadd.f32 %v599, %v899
      %v901 = vpop.f32.mrb[0].mxu0
      %902 = vmatprep.mubr.bf16.mxu0 0
      %903 = vmatmul.mubr.bf16.gmra.mrb[0].mxu0 %v780
      %v904 = vpop.f32.mrb[0].mxu0
      %v905 = vadd.f32 %v604, %v904
      %v906 = vpop.f32.mrb[0].mxu0
      %v907 = vpop.f32.mrb[0].mxu0
      %v908 = vadd.f32 %v607, %v907
      %v909 = vpop.f32.mrb[0].mxu0
      %910 = vmatprep.mubr.bf16.mxu0 0
      %911 = vmatmul.mubr.bf16.gmra.mrb[0].mxu0 %v783
      %v912 = vpop.f32.mrb[0].mxu0
      %v913 = vadd.f32 %v612, %v912
      %v914 = vpop.f32.mrb[0].mxu0
      %v915 = vpop.f32.mrb[0].mxu0
      %v916 = vadd.f32 %v615, %v915
      %v917 = vpop.f32.mrb[0].mxu0
      %918 = vmatprep.mubr.bf16.mxu0 0
      %919 = vmatmul.mubr.bf16.gmra.mrb[0].mxu0 %v786
      %v920 = vpop.f32.mrb[0].mxu0
      %v921 = vadd.f32 %v620, %v920
      %v922 = vpop.f32.mrb[0].mxu0
      %v923 = vpop.f32.mrb[0].mxu0
      %v924 = vadd.f32 %v623, %v923
      %v925 = vpop.f32.mrb[0].mxu0
      %926 = vmatprep.mubr.bf16.mxu0 0
      %927 = vmatmul.mubr.bf16.gmra.mrb[0].mxu0 %v789
      %v928 = vpop.f32.mrb[0].mxu0
      %v929 = vadd.f32 %v628, %v928
      %v930 = vpop.f32.mrb[0].mxu0
      %v931 = vpop.f32.mrb[0].mxu0
      %v932 = vadd.f32 %v631, %v931
      %v933 = vpop.f32.mrb[0].mxu0
      %934 = vmatprep.mubr.bf16.mxu0 0
      %935 = vmatmul.mubr.bf16.gmra.mrb[0].mxu0 %v792
      %v936 = vpop.f32.mrb[0].mxu0
      %v937 = vadd.f32 %v636, %v936
      %v938 = vpop.f32.mrb[0].mxu0
      %v939 = vpop.f32.mrb[0].mxu0
      %v940 = vadd.f32 %v639, %v939
      %v941 = vpop.f32.mrb[0].mxu0
      %942 = vmatprep.mubr.bf16.mxu0 0
      %943 = vmatmul.mubr.bf16.gmra.mrb[0].mxu0 %v795
      %v944 = vpop.f32.mrb[0].mxu0
      %v945 = vadd.f32 %v644, %v944
      %v946 = vpop.f32.mrb[0].mxu0
      %v947 = vpop.f32.mrb[0].mxu0
      %v948 = vadd.f32 %v647, %v947
      %v949 = vpop.f32.mrb[0].mxu0
      %950 = vmatprep.mubr.bf16.mxu0 0
      %951 = vmatmul.mubr.bf16.gmra.mrb[0].mxu0 %v798
      %v952 = vpop.f32.mrb[0].mxu0
      %v953 = vadd.f32 %v652, %v952
      %v954 = vpop.f32.mrb[0].mxu0
      %v955 = vpop.f32.mrb[0].mxu0
      %v956 = vadd.f32 %v655, %v955
      %v957 = vpop.f32.mrb[0].mxu0
      %958 = vmatprep.mubr.bf16.mxu0 0
      %959 = vmatmul.mubr.bf16.gmra.mrb[0].mxu0 %v801
      %v960 = vpop.f32.mrb[0].mxu0
      %v961 = vadd.f32 %v660, %v960
      %v962 = vpop.f32.mrb[0].mxu0
      %v963 = vpop.f32.mrb[0].mxu0
      %v964 = vadd.f32 %v663, %v963
      %v965 = vpop.f32.mrb[0].mxu0
      %966 = vdwg.mxu0
      %s967 = sadd.s32 %s284, 2
      %s968 = smul.u32 %s967, 2
      %s969 = smul.addr %s968, 4
      %s970 = scalar_lea.vmem %s258, %s969
      %v971 = vld [vmem:[%s970] sm:$0xf]
      %v972 = vld [vmem:[%s970 + $0x4] sm:$0xf]
      %v973 = vld [vmem:[%s970 + $0x8] sm:$0xf]
      %v974 = vld [vmem:[%s970 + $0xc] sm:$0xf]
      %v975 = vld [vmem:[%s970 + $0x10] sm:$0xf]
      %v976 = vld [vmem:[%s970 + $0x14] sm:$0xf]
      %v977 = vld [vmem:[%s970 + $0x18] sm:$0xf]
      %v978 = vld [vmem:[%s970 + $0x1c] sm:$0xf]
      %v979 = vld [vmem:[%s970 + $0x20] sm:$0xf]
      %v980 = vld [vmem:[%s970 + $0x24] sm:$0xf]
      %v981 = vld [vmem:[%s970 + $0x28] sm:$0xf]
      %v982 = vld [vmem:[%s970 + $0x2c] sm:$0xf]
      %v983 = vld [vmem:[%s970 + $0x30] sm:$0xf]
      %v984 = vld [vmem:[%s970 + $0x34] sm:$0xf]
      %v985 = vld [vmem:[%s970 + $0x38] sm:$0xf]
      %v986 = vld [vmem:[%s970 + $0x3c] sm:$0xf]
      %v987 = vld [vmem:[%s970 + $0x40] sm:$0xf]
      %v988 = vld [vmem:[%s970 + $0x44] sm:$0xf]
      %v989 = vld [vmem:[%s970 + $0x48] sm:$0xf]
      %v990 = vld [vmem:[%s970 + $0x4c] sm:$0xf]
      %v991 = vld [vmem:[%s970 + $0x50] sm:$0xf]
      %v992 = vld [vmem:[%s970 + $0x54] sm:$0xf]
      %v993 = vld [vmem:[%s970 + $0x58] sm:$0xf]
      %v994 = vld [vmem:[%s970 + $0x5c] sm:$0xf]
      %v995 = vld [vmem:[%s970 + $0x60] sm:$0xf]
      %v996 = vld [vmem:[%s970 + $0x64] sm:$0xf]
      %v997 = vld [vmem:[%s970 + $0x68] sm:$0xf]
      %v998 = vld [vmem:[%s970 + $0x6c] sm:$0xf]
      %v999 = vld [vmem:[%s970 + $0x70] sm:$0xf]
      %v1000 = vld [vmem:[%s970 + $0x74] sm:$0xf]
      %v1001 = vld [vmem:[%s970 + $0x78] sm:$0xf]
      %v1002 = vld [vmem:[%s970 + $0x7c] sm:$0xf]
      %s1003 = scalar_lea.vmem %s262, 24
      %v1004 = vld [vmem:[%s1003] sm:$0xf]
      %v1005 = vld [vmem:[%s1003 + $0x4] sm:$0xf]
      %v1006 = vld [vmem:[%s1003 + $0x8] sm:$0xf]
      %v1039 = vunpack.c.l.b16 %v971
      %v1040 = vunpack.c.l.b16 %v972
      %v1041 = vunpack.c.l.b16 %v973
      %v1042 = vunpack.c.l.b16 %v974
      %v1043 = vunpack.c.l.b16 %v975
      %v1044 = vunpack.c.l.b16 %v976
      %v1045 = vunpack.c.l.b16 %v977
      %v1046 = vunpack.c.l.b16 %v978
      %v1047 = vunpack.c.l.b16 %v979
      %v1048 = vunpack.c.l.b16 %v980
      %v1049 = vunpack.c.l.b16 %v981
      %v1050 = vunpack.c.l.b16 %v982
      %v1051 = vunpack.c.l.b16 %v983
      %v1052 = vunpack.c.l.b16 %v984
      %v1053 = vunpack.c.l.b16 %v985
      %v1054 = vunpack.c.l.b16 %v986
      %v1055 = vunpack.c.l.b16 %v987
      %v1056 = vunpack.c.l.b16 %v988
      %v1057 = vunpack.c.l.b16 %v989
      %v1058 = vunpack.c.l.b16 %v990
      %v1059 = vunpack.c.l.b16 %v991
      %v1060 = vunpack.c.l.b16 %v992
      %v1061 = vunpack.c.l.b16 %v993
      %v1062 = vunpack.c.l.b16 %v994
      %v1063 = vunpack.c.l.b16 %v995
      %v1064 = vunpack.c.l.b16 %v996
      %v1065 = vunpack.c.l.b16 %v997
      %v1066 = vunpack.c.l.b16 %v998
      %v1067 = vunpack.c.l.b16 %v999
      %v1068 = vunpack.c.l.b16 %v1000
      %v1069 = vunpack.c.l.b16 %v1001
      %v1070 = vunpack.c.l.b16 %v1002
      %v1071 = vpack.c.b16 %v1040, %v1039
      %v1072 = vpack.c.b16 %v1042, %v1041
      %v1073 = vpack.c.b16 %v1044, %v1043
      %v1074 = vpack.c.b16 %v1046, %v1045
      %v1075 = vpack.c.b16 %v1048, %v1047
      %v1076 = vpack.c.b16 %v1050, %v1049
      %v1077 = vpack.c.b16 %v1052, %v1051
      %v1078 = vpack.c.b16 %v1054, %v1053
      %v1079 = vpack.c.b16 %v1056, %v1055
      %v1080 = vpack.c.b16 %v1058, %v1057
      %v1081 = vpack.c.b16 %v1060, %v1059
      %v1082 = vpack.c.b16 %v1062, %v1061
      %v1083 = vpack.c.b16 %v1064, %v1063
      %v1084 = vpack.c.b16 %v1066, %v1065
      %v1085 = vpack.c.b16 %v1068, %v1067
      %v1086 = vpack.c.b16 %v1070, %v1069
      %v1090 = vunpack.c.l.b16 %v1004
      %v1091 = vunpack.c.l.b16 %v1005
      %v1092 = vunpack.c.l.b16 %v1006
      %v1093 = vpack.c.b16 %v1091, %v1090
      %v1094 = vpack.c.b16 %v1092, %v1092
      %v1097 = vsel %vm452, %v1071, 0
      %v1100 = vsel %vm452, %v1072, 0
      %v1103 = vsel %vm452, %v1073, 0
      %v1106 = vsel %vm452, %v1074, 0
      %v1109 = vsel %vm452, %v1075, 0
      %v1112 = vsel %vm452, %v1076, 0
      %v1115 = vsel %vm452, %v1077, 0
      %v1118 = vsel %vm452, %v1078, 0
      %v1121 = vsel %vm452, %v1079, 0
      %v1124 = vsel %vm452, %v1080, 0
      %v1127 = vsel %vm452, %v1081, 0
      %v1130 = vsel %vm452, %v1082, 0
      %v1133 = vsel %vm452, %v1083, 0
      %v1136 = vsel %vm452, %v1084, 0
      %v1139 = vsel %vm452, %v1085, 0
      %v1142 = vsel %vm452, %v1086, 0
      %v1145 = vsel %vm501, %v1094, 0
      %1147 = vmatprep.subr.bf16.mxu0 0
      %1148 = vmatpush1.bf16.msra.mxu0 %v1093
      %1149 = vmatprep.subr.bf16.mxu0 0
      %1150 = vmatpush1.bf16.msra.mxu0 %v1145
      %1151 = vmatprep.subr.bf16.mxu0 0
      %1152 = vmatpush1.bf16.msra.mxu0 0
      %1153 = vmatprep.subr.bf16.mxu0 0
      %1154 = vmatpush1.bf16.msra.mxu0 0
      %1155 = vmatprep.subr.bf16.mxu0 0
      %1156 = vmatpush1.bf16.msra.mxu0 0
      %1157 = vmatprep.subr.bf16.mxu0 0
      %1158 = vmatpush1.bf16.msra.mxu0 0
      %1159 = vmatprep.subr.bf16.mxu0 0
      %1160 = vmatpush1.bf16.msra.mxu0 0
      %1161 = vmatprep.subr.bf16.mxu0 0
      %1162 = vmatpush1.bf16.msra.mxu0 0
      %1163 = vmatprep.subr.bf16.mxu0 0
      %1164 = vmatpush1.bf16.msra.mxu0 0
      %1165 = vmatprep.subr.bf16.mxu0 0
      %1166 = vmatpush1.bf16.msra.mxu0 0
      %1167 = vmatprep.subr.bf16.mxu0 0
      %1168 = vmatpush1.bf16.msra.mxu0 0
      %1169 = vmatprep.subr.bf16.mxu0 0
      %1170 = vmatpush1.bf16.msra.mxu0 0
      %1171 = vmatprep.subr.bf16.mxu0 0
      %1172 = vmatpush1.bf16.msra.mxu0 0
      %1173 = vmatprep.subr.bf16.mxu0 0
      %1174 = vmatpush1.bf16.msra.mxu0 0
      %1175 = vmatprep.subr.bf16.mxu0 0
      %1176 = vmatpush1.bf16.msra.mxu0 0
      %1177 = vmatprep.subr.bf16.mxu0 0
      %1178 = vmatpush1.bf16.msra.mxu0 0
      %1179 = vmatprep.mubr.bf16.mxu0 0
      %1180 = vmatmul.mubr.bf16.gmra.mrb[0].mxu0 %v1097
      %v1181 = vpop.f32.mrb[0].mxu0
      %v1182 = vadd.f32 0.0, %v1181
      %v1183 = vpop.f32.mrb[0].mxu0
      %v1184 = vpop.f32.mrb[0].mxu0
      %v1185 = vadd.f32 0.0, %v1184
      %v1186 = vpop.f32.mrb[0].mxu0
      %1187 = vmatprep.mubr.bf16.mxu0 0
      %1188 = vmatmul.mubr.bf16.gmra.mrb[0].mxu0 %v1100
      %v1189 = vpop.f32.mrb[0].mxu0
      %v1190 = vadd.f32 0.0, %v1189
      %v1191 = vpop.f32.mrb[0].mxu0
      %v1192 = vpop.f32.mrb[0].mxu0
      %v1193 = vadd.f32 0.0, %v1192
      %v1194 = vpop.f32.mrb[0].mxu0
      %1195 = vmatprep.mubr.bf16.mxu0 0
      %1196 = vmatmul.mubr.bf16.gmra.mrb[0].mxu0 %v1103
      %v1197 = vpop.f32.mrb[0].mxu0
      %v1198 = vadd.f32 0.0, %v1197
      %v1199 = vpop.f32.mrb[0].mxu0
      %v1200 = vpop.f32.mrb[0].mxu0
      %v1201 = vadd.f32 0.0, %v1200
      %v1202 = vpop.f32.mrb[0].mxu0
      %1203 = vmatprep.mubr.bf16.mxu0 0
      %1204 = vmatmul.mubr.bf16.gmra.mrb[0].mxu0 %v1106
      %v1205 = vpop.f32.mrb[0].mxu0
      %v1206 = vadd.f32 0.0, %v1205
      %v1207 = vpop.f32.mrb[0].mxu0
      %v1208 = vpop.f32.mrb[0].mxu0
      %v1209 = vadd.f32 0.0, %v1208
      %v1210 = vpop.f32.mrb[0].mxu0
      %1211 = vmatprep.mubr.bf16.mxu0 0
      %1212 = vmatmul.mubr.bf16.gmra.mrb[0].mxu0 %v1109
      %v1213 = vpop.f32.mrb[0].mxu0
      %v1214 = vadd.f32 0.0, %v1213
      %v1215 = vpop.f32.mrb[0].mxu0
      %v1216 = vpop.f32.mrb[0].mxu0
      %v1217 = vadd.f32 0.0, %v1216
      %v1218 = vpop.f32.mrb[0].mxu0
      %1219 = vmatprep.mubr.bf16.mxu0 0
      %1220 = vmatmul.mubr.bf16.gmra.mrb[0].mxu0 %v1112
      %v1221 = vpop.f32.mrb[0].mxu0
      %v1222 = vadd.f32 0.0, %v1221
      %v1223 = vpop.f32.mrb[0].mxu0
      %v1224 = vpop.f32.mrb[0].mxu0
      %v1225 = vadd.f32 0.0, %v1224
      %v1226 = vpop.f32.mrb[0].mxu0
      %1227 = vmatprep.mubr.bf16.mxu0 0
      %1228 = vmatmul.mubr.bf16.gmra.mrb[0].mxu0 %v1115
      %v1229 = vpop.f32.mrb[0].mxu0
      %v1230 = vadd.f32 0.0, %v1229
      %v1231 = vpop.f32.mrb[0].mxu0
      %v1232 = vpop.f32.mrb[0].mxu0
      %v1233 = vadd.f32 0.0, %v1232
      %v1234 = vpop.f32.mrb[0].mxu0
      %1235 = vmatprep.mubr.bf16.mxu0 0
      %1236 = vmatmul.mubr.bf16.gmra.mrb[0].mxu0 %v1118
      %v1237 = vpop.f32.mrb[0].mxu0
      %v1238 = vadd.f32 0.0, %v1237
      %v1239 = vpop.f32.mrb[0].mxu0
      %v1240 = vpop.f32.mrb[0].mxu0
      %v1241 = vadd.f32 0.0, %v1240
      %v1242 = vpop.f32.mrb[0].mxu0
      %1243 = vmatprep.mubr.bf16.mxu0 0
      %1244 = vmatmul.mubr.bf16.gmra.mrb[0].mxu0 %v1121
      %v1245 = vpop.f32.mrb[0].mxu0
      %v1246 = vadd.f32 0.0, %v1245
      %v1247 = vpop.f32.mrb[0].mxu0
      %v1248 = vpop.f32.mrb[0].mxu0
      %v1249 = vadd.f32 0.0, %v1248
      %v1250 = vpop.f32.mrb[0].mxu0
      %1251 = vmatprep.mubr.bf16.mxu0 0
      %1252 = vmatmul.mubr.bf16.gmra.mrb[0].mxu0 %v1124
      %v1253 = vpop.f32.mrb[0].mxu0
      %v1254 = vadd.f32 0.0, %v1253
      %v1255 = vpop.f32.mrb[0].mxu0
      %v1256 = vpop.f32.mrb[0].mxu0
      %v1257 = vadd.f32 0.0, %v1256
      %v1258 = vpop.f32.mrb[0].mxu0
      %1259 = vmatprep.mubr.bf16.mxu0 0
      %1260 = vmatmul.mubr.bf16.gmra.mrb[0].mxu0 %v1127
      %v1261 = vpop.f32.mrb[0].mxu0
      %v1262 = vadd.f32 0.0, %v1261
      %v1263 = vpop.f32.mrb[0].mxu0
      %v1264 = vpop.f32.mrb[0].mxu0
      %v1265 = vadd.f32 0.0, %v1264
      %v1266 = vpop.f32.mrb[0].mxu0
      %1267 = vmatprep.mubr.bf16.mxu0 0
      %1268 = vmatmul.mubr.bf16.gmra.mrb[0].mxu0 %v1130
      %v1269 = vpop.f32.mrb[0].mxu0
      %v1270 = vadd.f32 0.0, %v1269
      %v1271 = vpop.f32.mrb[0].mxu0
      %v1272 = vpop.f32.mrb[0].mxu0
      %v1273 = vadd.f32 0.0, %v1272
      %v1274 = vpop.f32.mrb[0].mxu0
      %1275 = vmatprep.mubr.bf16.mxu0 0
      %1276 = vmatmul.mubr.bf16.gmra.mrb[0].mxu0 %v1133
      %v1277 = vpop.f32.mrb[0].mxu0
      %v1278 = vadd.f32 0.0, %v1277
      %v1279 = vpop.f32.mrb[0].mxu0
      %v1280 = vpop.f32.mrb[0].mxu0
      %v1281 = vadd.f32 0.0, %v1280
      %v1282 = vpop.f32.mrb[0].mxu0
      %1283 = vmatprep.mubr.bf16.mxu0 0
      %1284 = vmatmul.mubr.bf16.gmra.mrb[0].mxu0 %v1136
      %v1285 = vpop.f32.mrb[0].mxu0
      %v1286 = vadd.f32 0.0, %v1285
      %v1287 = vpop.f32.mrb[0].mxu0
      %v1288 = vpop.f32.mrb[0].mxu0
      %v1289 = vadd.f32 0.0, %v1288
      %v1290 = vpop.f32.mrb[0].mxu0
      %1291 = vmatprep.mubr.bf16.mxu0 0
      %1292 = vmatmul.mubr.bf16.gmra.mrb[0].mxu0 %v1139
      %v1293 = vpop.f32.mrb[0].mxu0
      %v1294 = vadd.f32 0.0, %v1293
      %v1295 = vpop.f32.mrb[0].mxu0
      %v1296 = vpop.f32.mrb[0].mxu0
      %v1297 = vadd.f32 0.0, %v1296
      %v1298 = vpop.f32.mrb[0].mxu0
      %1299 = vmatprep.mubr.bf16.mxu0 0
      %1300 = vmatmul.mubr.bf16.gmra.mrb[0].mxu0 %v1142
      %v1301 = vpop.f32.mrb[0].mxu0
      %v1302 = vadd.f32 0.0, %v1301
      %v1303 = vpop.f32.mrb[0].mxu0
      %v1304 = vpop.f32.mrb[0].mxu0
      %v1305 = vadd.f32 0.0, %v1304
      %v1306 = vpop.f32.mrb[0].mxu0
      %1307 = vdwg.mxu0
      %v1308 = vadd.f32 %v841, %v1182
      %v1309 = vadd.f32 %v844, %v1185
      %v1310 = vadd.f32 %v849, %v1190
      %v1311 = vadd.f32 %v852, %v1193
      %v1312 = vadd.f32 %v857, %v1198
      %v1313 = vadd.f32 %v860, %v1201
      %v1314 = vadd.f32 %v865, %v1206
      %v1315 = vadd.f32 %v868, %v1209
      %v1316 = vadd.f32 %v873, %v1214
      %v1317 = vadd.f32 %v876, %v1217
      %v1318 = vadd.f32 %v881, %v1222
      %v1319 = vadd.f32 %v884, %v1225
      %v1320 = vadd.f32 %v889, %v1230
      %v1321 = vadd.f32 %v892, %v1233
      %v1322 = vadd.f32 %v897, %v1238
      %v1323 = vadd.f32 %v900, %v1241
      %v1324 = vadd.f32 %v905, %v1246
      %v1325 = vadd.f32 %v908, %v1249
      %v1326 = vadd.f32 %v913, %v1254
      %v1327 = vadd.f32 %v916, %v1257
      %v1328 = vadd.f32 %v921, %v1262
      %v1329 = vadd.f32 %v924, %v1265
      %v1330 = vadd.f32 %v929, %v1270
      %v1331 = vadd.f32 %v932, %v1273
      %v1332 = vadd.f32 %v937, %v1278
      %v1333 = vadd.f32 %v940, %v1281
      %v1334 = vadd.f32 %v945, %v1286
      %v1335 = vadd.f32 %v948, %v1289
      %v1336 = vadd.f32 %v953, %v1294
      %v1337 = vadd.f32 %v956, %v1297
      %v1338 = vadd.f32 %v961, %v1302
      %v1339 = vadd.f32 %v964, %v1305
      %v1340 = vld [vmem:[%s265] sm:$0x1]
      %v1342 = vlaneseq
      %v1343 = vshrl.u32 %v1342, 7
      %v1344 = vsub.s32 0, %v1343
      %v1345 = vrot.slane %v1340, %v1344
      %v1347 = vmul.f32 %v1308, %v1345
      %v1348 = vmul.f32 %v1309, %v1345
      %v1349 = vmul.f32 %v1310, %v1345
      %v1350 = vmul.f32 %v1311, %v1345
      %v1351 = vmul.f32 %v1312, %v1345
      %v1352 = vmul.f32 %v1313, %v1345
      %v1353 = vmul.f32 %v1314, %v1345
      %v1354 = vmul.f32 %v1315, %v1345
      %v1355 = vmul.f32 %v1316, %v1345
      %v1356 = vmul.f32 %v1317, %v1345
      %v1357 = vmul.f32 %v1318, %v1345
      %v1358 = vmul.f32 %v1319, %v1345
      %v1359 = vmul.f32 %v1320, %v1345
      %v1360 = vmul.f32 %v1321, %v1345
      %v1361 = vmul.f32 %v1322, %v1345
      %v1362 = vmul.f32 %v1323, %v1345
      %v1363 = vmul.f32 %v1324, %v1345
      %v1364 = vmul.f32 %v1325, %v1345
      %v1365 = vmul.f32 %v1326, %v1345
      %v1366 = vmul.f32 %v1327, %v1345
      %v1367 = vmul.f32 %v1328, %v1345
      %v1368 = vmul.f32 %v1329, %v1345
      %v1369 = vmul.f32 %v1330, %v1345
      %v1370 = vmul.f32 %v1331, %v1345
      %v1371 = vmul.f32 %v1332, %v1345
      %v1372 = vmul.f32 %v1333, %v1345
      %v1373 = vmul.f32 %v1334, %v1345
      %v1374 = vmul.f32 %v1335, %v1345
      %v1375 = vmul.f32 %v1336, %v1345
      %v1376 = vmul.f32 %v1337, %v1345
      %v1377 = vmul.f32 %v1338, %v1345
      %v1378 = vmul.f32 %v1339, %v1345
      %v1379 = vld [vmem:[%s268] sm:$0x1]
      %v1381 = vlaneseq
      %v1382 = vshrl.u32 %v1381, 7
      %v1383 = vsub.s32 0, %v1382
      %v1384 = vrot.slane %v1379, %v1383
      %v1386 = vadd.f32 %v1347, %v1384
      %v1387 = vadd.f32 %v1348, %v1384
      %v1388 = vadd.f32 %v1349, %v1384
      %v1389 = vadd.f32 %v1350, %v1384
      %v1390 = vadd.f32 %v1351, %v1384
      %v1391 = vadd.f32 %v1352, %v1384
      %v1392 = vadd.f32 %v1353, %v1384
      %v1393 = vadd.f32 %v1354, %v1384
      %v1394 = vadd.f32 %v1355, %v1384
      %v1395 = vadd.f32 %v1356, %v1384
      %v1396 = vadd.f32 %v1357, %v1384
      %v1397 = vadd.f32 %v1358, %v1384
      %v1398 = vadd.f32 %v1359, %v1384
      %v1399 = vadd.f32 %v1360, %v1384
      %v1400 = vadd.f32 %v1361, %v1384
      %v1401 = vadd.f32 %v1362, %v1384
      %v1402 = vadd.f32 %v1363, %v1384
      %v1403 = vadd.f32 %v1364, %v1384
      %v1404 = vadd.f32 %v1365, %v1384
      %v1405 = vadd.f32 %v1366, %v1384
      %v1406 = vadd.f32 %v1367, %v1384
      %v1407 = vadd.f32 %v1368, %v1384
      %v1408 = vadd.f32 %v1369, %v1384
      %v1409 = vadd.f32 %v1370, %v1384
      %v1410 = vadd.f32 %v1371, %v1384
      %v1411 = vadd.f32 %v1372, %v1384
      %v1412 = vadd.f32 %v1373, %v1384
      %v1413 = vadd.f32 %v1374, %v1384
      %v1414 = vadd.f32 %v1375, %v1384
      %v1415 = vadd.f32 %v1376, %v1384
      %v1416 = vadd.f32 %v1377, %v1384
      %v1417 = vadd.f32 %v1378, %v1384
      %v1418 = vxor.u32 %v1386, 2147483648
      %v1419 = vxor.u32 %v1387, 2147483648
      %v1420 = vxor.u32 %v1388, 2147483648
      %v1421 = vxor.u32 %v1389, 2147483648
      %v1422 = vxor.u32 %v1390, 2147483648
      %v1423 = vxor.u32 %v1391, 2147483648
      %v1424 = vxor.u32 %v1392, 2147483648
      %v1425 = vxor.u32 %v1393, 2147483648
      %v1426 = vxor.u32 %v1394, 2147483648
      %v1427 = vxor.u32 %v1395, 2147483648
      %v1428 = vxor.u32 %v1396, 2147483648
      %v1429 = vxor.u32 %v1397, 2147483648
      %v1430 = vxor.u32 %v1398, 2147483648
      %v1431 = vxor.u32 %v1399, 2147483648
      %v1432 = vxor.u32 %v1400, 2147483648
      %v1433 = vxor.u32 %v1401, 2147483648
      %v1434 = vxor.u32 %v1402, 2147483648
      %v1435 = vxor.u32 %v1403, 2147483648
      %v1436 = vxor.u32 %v1404, 2147483648
      %v1437 = vxor.u32 %v1405, 2147483648
      %v1438 = vxor.u32 %v1406, 2147483648
      %v1439 = vxor.u32 %v1407, 2147483648
      %v1440 = vxor.u32 %v1408, 2147483648
      %v1441 = vxor.u32 %v1409, 2147483648
      %v1442 = vxor.u32 %v1410, 2147483648
      %v1443 = vxor.u32 %v1411, 2147483648
      %v1444 = vxor.u32 %v1412, 2147483648
      %v1445 = vxor.u32 %v1413, 2147483648
      %v1446 = vxor.u32 %v1414, 2147483648
      %v1447 = vxor.u32 %v1415, 2147483648
      %v1448 = vxor.u32 %v1416, 2147483648
      %v1449 = vxor.u32 %v1417, 2147483648
      %v1450 = vmul.f32 %v1418, 1.442695
      %v1451 = vpow.pop %v1450
      %v1452 = vmul.f32 %v1419, 1.442695
      %v1453 = vpow.pop %v1452
      %v1454 = vmul.f32 %v1420, 1.442695
      %v1455 = vpow.pop %v1454
      %v1456 = vmul.f32 %v1421, 1.442695
      %v1457 = vpow.pop %v1456
      %v1458 = vmul.f32 %v1422, 1.442695
      %v1459 = vpow.pop %v1458
      %v1460 = vmul.f32 %v1423, 1.442695
      %v1461 = vpow.pop %v1460
      %v1462 = vmul.f32 %v1424, 1.442695
      %v1463 = vpow.pop %v1462
      %v1464 = vmul.f32 %v1425, 1.442695
      %v1465 = vpow.pop %v1464
      %v1466 = vmul.f32 %v1426, 1.442695
      %v1467 = vpow.pop %v1466
      %v1468 = vmul.f32 %v1427, 1.442695
      %v1469 = vpow.pop %v1468
      %v1470 = vmul.f32 %v1428, 1.442695
      %v1471 = vpow.pop %v1470
      %v1472 = vmul.f32 %v1429, 1.442695
      %v1473 = vpow.pop %v1472
      %v1474 = vmul.f32 %v1430, 1.442695
      %v1475 = vpow.pop %v1474
      %v1476 = vmul.f32 %v1431, 1.442695
      %v1477 = vpow.pop %v1476
      %v1478 = vmul.f32 %v1432, 1.442695
      %v1479 = vpow.pop %v1478
      %v1480 = vmul.f32 %v1433, 1.442695
      %v1481 = vpow.pop %v1480
      %v1482 = vmul.f32 %v1434, 1.442695
      %v1483 = vpow.pop %v1482
      %v1484 = vmul.f32 %v1435, 1.442695
      %v1485 = vpow.pop %v1484
      %v1486 = vmul.f32 %v1436, 1.442695
      %v1487 = vpow.pop %v1486
      %v1488 = vmul.f32 %v1437, 1.442695
      %v1489 = vpow.pop %v1488
      %v1490 = vmul.f32 %v1438, 1.442695
      %v1491 = vpow.pop %v1490
      %v1492 = vmul.f32 %v1439, 1.442695
      %v1493 = vpow.pop %v1492
      %v1494 = vmul.f32 %v1440, 1.442695
      %v1495 = vpow.pop %v1494
      %v1496 = vmul.f32 %v1441, 1.442695
      %v1497 = vpow.pop %v1496
      %v1498 = vmul.f32 %v1442, 1.442695
      %v1499 = vpow.pop %v1498
      %v1500 = vmul.f32 %v1443, 1.442695
      %v1501 = vpow.pop %v1500
      %v1502 = vmul.f32 %v1444, 1.442695
      %v1503 = vpow.pop %v1502
      %v1504 = vmul.f32 %v1445, 1.442695
      %v1505 = vpow.pop %v1504
      %v1506 = vmul.f32 %v1446, 1.442695
      %v1507 = vpow.pop %v1506
      %v1508 = vmul.f32 %v1447, 1.442695
      %v1509 = vpow.pop %v1508
      %v1510 = vmul.f32 %v1448, 1.442695
      %v1511 = vpow.pop %v1510
      %v1512 = vmul.f32 %v1449, 1.442695
      %v1513 = vpow.pop %v1512
      %v1514 = vadd.f32 %v1451, 1.0
      %v1515 = vadd.f32 %v1453, 1.0
      %v1516 = vadd.f32 %v1455, 1.0
      %v1517 = vadd.f32 %v1457, 1.0
      %v1518 = vadd.f32 %v1459, 1.0
      %v1519 = vadd.f32 %v1461, 1.0
      %v1520 = vadd.f32 %v1463, 1.0
      %v1521 = vadd.f32 %v1465, 1.0
      %v1522 = vadd.f32 %v1467, 1.0
      %v1523 = vadd.f32 %v1469, 1.0
      %v1524 = vadd.f32 %v1471, 1.0
      %v1525 = vadd.f32 %v1473, 1.0
      %v1526 = vadd.f32 %v1475, 1.0
      %v1527 = vadd.f32 %v1477, 1.0
      %v1528 = vadd.f32 %v1479, 1.0
      %v1529 = vadd.f32 %v1481, 1.0
      %v1530 = vadd.f32 %v1483, 1.0
      %v1531 = vadd.f32 %v1485, 1.0
      %v1532 = vadd.f32 %v1487, 1.0
      %v1533 = vadd.f32 %v1489, 1.0
      %v1534 = vadd.f32 %v1491, 1.0
      %v1535 = vadd.f32 %v1493, 1.0
      %v1536 = vadd.f32 %v1495, 1.0
      %v1537 = vadd.f32 %v1497, 1.0
      %v1538 = vadd.f32 %v1499, 1.0
      %v1539 = vadd.f32 %v1501, 1.0
      %v1540 = vadd.f32 %v1503, 1.0
      %v1541 = vadd.f32 %v1505, 1.0
      %v1542 = vadd.f32 %v1507, 1.0
      %v1543 = vadd.f32 %v1509, 1.0
      %v1544 = vadd.f32 %v1511, 1.0
      %v1545 = vadd.f32 %v1513, 1.0
      %v1546 = vrcp.pop %v1514
      %v1547 = vmul.f32 1.0, %v1546
      %v1548 = vrcp.pop %v1515
      %v1549 = vmul.f32 1.0, %v1548
      %v1550 = vrcp.pop %v1516
      %v1551 = vmul.f32 1.0, %v1550
      %v1552 = vrcp.pop %v1517
      %v1553 = vmul.f32 1.0, %v1552
      %v1554 = vrcp.pop %v1518
      %v1555 = vmul.f32 1.0, %v1554
      %v1556 = vrcp.pop %v1519
      %v1557 = vmul.f32 1.0, %v1556
      %v1558 = vrcp.pop %v1520
      %v1559 = vmul.f32 1.0, %v1558
      %v1560 = vrcp.pop %v1521
      %v1561 = vmul.f32 1.0, %v1560
      %v1562 = vrcp.pop %v1522
      %v1563 = vmul.f32 1.0, %v1562
      %v1564 = vrcp.pop %v1523
      %v1565 = vmul.f32 1.0, %v1564
      %v1566 = vrcp.pop %v1524
      %v1567 = vmul.f32 1.0, %v1566
      %v1568 = vrcp.pop %v1525
      %v1569 = vmul.f32 1.0, %v1568
      %v1570 = vrcp.pop %v1526
      %v1571 = vmul.f32 1.0, %v1570
      %v1572 = vrcp.pop %v1527
      %v1573 = vmul.f32 1.0, %v1572
      %v1574 = vrcp.pop %v1528
      %v1575 = vmul.f32 1.0, %v1574
      %v1576 = vrcp.pop %v1529
      %v1577 = vmul.f32 1.0, %v1576
      %v1578 = vrcp.pop %v1530
      %v1579 = vmul.f32 1.0, %v1578
      %v1580 = vrcp.pop %v1531
      %v1581 = vmul.f32 1.0, %v1580
      %v1582 = vrcp.pop %v1532
      %v1583 = vmul.f32 1.0, %v1582
      %v1584 = vrcp.pop %v1533
      %v1585 = vmul.f32 1.0, %v1584
      %v1586 = vrcp.pop %v1534
      %v1587 = vmul.f32 1.0, %v1586
      %v1588 = vrcp.pop %v1535
      %v1589 = vmul.f32 1.0, %v1588
      %v1590 = vrcp.pop %v1536
      %v1591 = vmul.f32 1.0, %v1590
      %v1592 = vrcp.pop %v1537
      %v1593 = vmul.f32 1.0, %v1592
      %v1594 = vrcp.pop %v1538
      %v1595 = vmul.f32 1.0, %v1594
      %v1596 = vrcp.pop %v1539
      %v1597 = vmul.f32 1.0, %v1596
      %v1598 = vrcp.pop %v1540
      %v1599 = vmul.f32 1.0, %v1598
      %v1600 = vrcp.pop %v1541
      %v1601 = vmul.f32 1.0, %v1600
      %v1602 = vrcp.pop %v1542
      %v1603 = vmul.f32 1.0, %v1602
      %v1604 = vrcp.pop %v1543
      %v1605 = vmul.f32 1.0, %v1604
      %v1606 = vrcp.pop %v1544
      %v1607 = vmul.f32 1.0, %v1606
      %v1608 = vrcp.pop %v1545
      %v1609 = vmul.f32 1.0, %v1608
      %v1610 = vmul.f32 %v1386, %v1547
      %v1611 = vmul.f32 %v1387, %v1549
      %v1612 = vmul.f32 %v1388, %v1551
      %v1613 = vmul.f32 %v1389, %v1553
      %v1614 = vmul.f32 %v1390, %v1555
      %v1615 = vmul.f32 %v1391, %v1557
      %v1616 = vmul.f32 %v1392, %v1559
      %v1617 = vmul.f32 %v1393, %v1561
      %v1618 = vmul.f32 %v1394, %v1563
      %v1619 = vmul.f32 %v1395, %v1565
      %v1620 = vmul.f32 %v1396, %v1567
      %v1621 = vmul.f32 %v1397, %v1569
      %v1622 = vmul.f32 %v1398, %v1571
      %v1623 = vmul.f32 %v1399, %v1573
      %v1624 = vmul.f32 %v1400, %v1575
      %v1625 = vmul.f32 %v1401, %v1577
      %v1626 = vmul.f32 %v1402, %v1579
      %v1627 = vmul.f32 %v1403, %v1581
      %v1628 = vmul.f32 %v1404, %v1583
      %v1629 = vmul.f32 %v1405, %v1585
      %v1630 = vmul.f32 %v1406, %v1587
      %v1631 = vmul.f32 %v1407, %v1589
      %v1632 = vmul.f32 %v1408, %v1591
      %v1633 = vmul.f32 %v1409, %v1593
      %v1634 = vmul.f32 %v1410, %v1595
      %v1635 = vmul.f32 %v1411, %v1597
      %v1636 = vmul.f32 %v1412, %v1599
      %v1637 = vmul.f32 %v1413, %v1601
      %v1638 = vmul.f32 %v1414, %v1603
      %v1639 = vmul.f32 %v1415, %v1605
      %v1640 = vmul.f32 %v1416, %v1607
      %v1641 = vmul.f32 %v1417, %v1609
      %1642 = vst [vmem:[%s281] sm:$0xff] %v1610
      %1643 = vst [vmem:[%s281 + $0x8] sm:$0xff] %v1611
      %1644 = vst [vmem:[%s281 + $0x10] sm:$0xff] %v1612
      %1645 = vst [vmem:[%s281 + $0x18] sm:$0xff] %v1613
      %1646 = vst [vmem:[%s281 + $0x20] sm:$0xff] %v1614
      %1647 = vst [vmem:[%s281 + $0x28] sm:$0xff] %v1615
      %1648 = vst [vmem:[%s281 + $0x30] sm:$0xff] %v1616
      %1649 = vst [vmem:[%s281 + $0x38] sm:$0xff] %v1617
      %1650 = vst [vmem:[%s281 + $0x40] sm:$0xff] %v1618
      %1651 = vst [vmem:[%s281 + $0x48] sm:$0xff] %v1619
      %1652 = vst [vmem:[%s281 + $0x50] sm:$0xff] %v1620
      %1653 = vst [vmem:[%s281 + $0x58] sm:$0xff] %v1621
      %1654 = vst [vmem:[%s281 + $0x60] sm:$0xff] %v1622
      %1655 = vst [vmem:[%s281 + $0x68] sm:$0xff] %v1623
      %1656 = vst [vmem:[%s281 + $0x70] sm:$0xff] %v1624
      %1657 = vst [vmem:[%s281 + $0x78] sm:$0xff] %v1625
      %1658 = vst [vmem:[%s281 + $0x80] sm:$0xff] %v1626
      %1659 = vst [vmem:[%s281 + $0x88] sm:$0xff] %v1627
      %1660 = vst [vmem:[%s281 + $0x90] sm:$0xff] %v1628
      %1661 = vst [vmem:[%s281 + $0x98] sm:$0xff] %v1629
      %1662 = vst [vmem:[%s281 + $0xa0] sm:$0xff] %v1630
      %1663 = vst [vmem:[%s281 + $0xa8] sm:$0xff] %v1631
      %1664 = vst [vmem:[%s281 + $0xb0] sm:$0xff] %v1632
      %1665 = vst [vmem:[%s281 + $0xb8] sm:$0xff] %v1633
      %1666 = vst [vmem:[%s281 + $0xc0] sm:$0xff] %v1634
      %1667 = vst [vmem:[%s281 + $0xc8] sm:$0xff] %v1635
      %1668 = vst [vmem:[%s281 + $0xd0] sm:$0xff] %v1636
      %1669 = vst [vmem:[%s281 + $0xd8] sm:$0xff] %v1637
      %1670 = vst [vmem:[%s281 + $0xe0] sm:$0xff] %v1638
      %1671 = vst [vmem:[%s281 + $0xe8] sm:$0xff] %v1639
      %1672 = vst [vmem:[%s281 + $0xf0] sm:$0xff] %v1640
      %1673 = vst [vmem:[%s281 + $0xf8] sm:$0xff] %v1641
      %s1674 = smul.u32 16, %s21
      %p1675 = scmp.lt.s32.totalorder %s20, 1
      %s1676 = scalar_select %p1675, %s20, 1
      %p1677 = scmp.lt.s32.totalorder %s1674, 15
      %s1678 = scalar_select %p1677, %s1674, 15
      %p1679 = scmp.lt.s32.totalorder %s22, 0
      %s1680 = scalar_select %p1679, %s22, 0
      %s1681 = smul.addr %s1678, 2
      %s1682 = sadd.s32 %s1680, %s1681
      %s1683 = smul.addr %s1676, 32
      %s1684 = sadd.s32 %s1682, %s1683
      %s1685 = smul.addr %s1684, 8
      %s1686 = scalar_lea.vmem %s4, %s1685
      // Predicated region
      $region37: #{base_conv_forward.1} parent=35 // pred_check
        %p1687 = pneg %p160
      $region38: #{base_conv_forward.1} parent=35 // pred_check_branch
        %1689 = sbr.rel (%p1687) target = $region40
      $region39: #{base_conv_forward.1} parent=35 // pred_region
        %s1690 = smul.u32 16, %s21
      $region40: #{base_conv_forward.1} parent=35 // pred_fallthru
        _
    $region36: #{base_conv_forward.1} parent=5 // pred_fallthru
      _
    %p1691 = scmp.le.s32.totalorder 2, %s10
    // Predicated region
    $region41: #{base_conv_forward.1} parent=5 // pred_check
      %p1692 = pneg %p1691
    $region42: #{base_conv_forward.1} parent=5 // pred_check_branch
      %1694 = sbr.rel (%p1692) target = $region44
    $region43: #{base_conv_forward.1} parent=5 // pred_region
      %s1695 = ssub.s32 %s10, 2
      // Predicated region
      $region45: #{base_conv_forward.1} parent=43 // pred_check
        %p1696 = pneg %p166
      $region46: #{base_conv_forward.1} parent=43 // pred_check_branch
        %1698 = sbr.rel (%p1696) target = $region48
      $region47: #{base_conv_forward.1} parent=43 // pred_region
        %s1699 = smul.u32 16, %s24
        %p1700 = scmp.lt.s32.totalorder %s23, 1
        %s1701 = scalar_select %p1700, %s23, 1
        %p1702 = scmp.lt.s32.totalorder %s1699, 15
        %s1703 = scalar_select %p1702, %s1699, 15
        %p1704 = scmp.lt.s32.totalorder %s25, 0
        %s1705 = scalar_select %p1704, %s25, 0
        %s1706 = smul.addr %s1703, 2
        %s1707 = sadd.s32 %s1705, %s1706
        %s1708 = smul.addr %s1701, 32
        %s1709 = sadd.s32 %s1707, %s1708
        %s1710 = smul.addr %s1709, 8
        %s1711 = scalar_lea.vmem %s4, %s1710
      $region48: #{base_conv_forward.1} parent=43 // pred_fallthru
        _
    $region44: #{base_conv_forward.1} parent=5 // pred_fallthru
      _
  $region6: #{base_conv_forward.1} parent=0 // loop_footer
    %s14 = sadd.s32 1, %s10
  $region7: #{base_conv_forward.1} parent=0 // loop_footer_branch
    %9 = sbr.rel target = $region3
  $region8: #{base_conv_forward.1} parent=0 // loop_exit
    _

</llo_original>
